<compile_context>
chip_gen: v5e
topology: v5e:2x2
jax: 0.10.0
libtpu: 0.0.40
codegen_flags: <defaults>
</compile_context>

<pallas_src>
import functools

import jax
import jax.numpy as jnp
from jax.experimental import pallas as pl
from jax.experimental.pallas import tpu as pltpu


# ----------------------------- kernels ------------------------------------ #

def _layer_norm(x, gamma, beta, eps=1e-5):
    mu = jnp.mean(x, axis=-1, keepdims=True)
    var = jnp.mean((x - mu) ** 2, axis=-1, keepdims=True)
    return (x - mu) * jax.lax.rsqrt(var + eps) * gamma + beta


def bert_encoder_kernel(x_ref, bias_ref,
                        wq_ref, bq_ref, wk_ref, bk_ref, wv_ref, bv_ref,
                        wo_ref, bo_ref,
                        w1_ref, b1_ref, w2_ref, b2_ref,
                        g1_ref, be1_ref, g2_ref, be2_ref,
                        o_ref, *, heads):
    """One (batch-block, layer) step of the fused encoder stack.

    o_ref is resident across the layer grid axis (its block index only depends
    on the batch axis) and carries the activation from layer to layer.
    """
    layer = pl.program_id(1)

    # Layer 0: seed the resident activation buffer from the input.
    @pl.when(layer == 0)
    def _():
        o_ref[...] = x_ref[...]

    Bt, S, E = o_ref.shape
    H = heads
    dh = E // H
    M = Bt * S

    x = o_ref[...].astype(jnp.float32)            # [Bt, S, E] residual stream (f32)
    xf = x.reshape(M, E)                          # fill the MXU M dimension
    xf_bf = xf.astype(jnp.bfloat16)

    wq = wq_ref[0]; wk = wk_ref[0]; wv = wv_ref[0]; wo = wo_ref[0]    # [E, E] bf16
    bq = bq_ref[0]; bk = bk_ref[0]; bv = bv_ref[0]; bo = bo_ref[0]    # [1, E] f32

    # QKV projections: bf16 MXU operands, f32 accumulation.
    q = jnp.dot(xf_bf, wq, preferred_element_type=jnp.float32) + bq
    k = jnp.dot(xf_bf, wk, preferred_element_type=jnp.float32) + bk
    v = jnp.dot(xf_bf, wv, preferred_element_type=jnp.float32) + bv

    q = q * (1.0 / (dh ** 0.5))                   # fold softmax scale into q once

    q3 = q.reshape(Bt, S, E).astype(jnp.bfloat16)
    k3 = k.reshape(Bt, S, E).astype(jnp.bfloat16)
    v3 = v.reshape(Bt, S, E).astype(jnp.bfloat16)
    bias = bias_ref[...]                          # [Bt, 1, S] key-only additive bias (f32)

    # Per-head attention (contraction depth is dh regardless of batching);
    # softmax / normalization kept in f32.  Contexts are concatenated once and
    # the out-projection is a single K=E matmul below.
    ctx_parts = []
    for h in range(H):                            # static, small head loop
        sl = slice(h * dh, (h + 1) * dh)
        s_h = jnp.einsum('bqd,bkd->bqk', q3[:, :, sl], k3[:, :, sl],
                         preferred_element_type=jnp.float32) + bias
        m_h = jnp.max(s_h, axis=-1, keepdims=True)
        p_h = jnp.exp(s_h - m_h)
        inv = pl.reciprocal(jnp.sum(p_h, axis=-1, keepdims=True), approx=True)
        ctx_parts.append(
            jnp.einsum('bqk,bkd->bqd', p_h.astype(jnp.bfloat16), v3[:, :, sl],
                       preferred_element_type=jnp.float32) * inv)
    ctx = jnp.concatenate(ctx_parts, axis=-1)     # [Bt, S, E], head-major columns
    attn = jnp.dot(ctx.reshape(M, E).astype(jnp.bfloat16), wo,
                   preferred_element_type=jnp.float32) + bo      # ONE fused out-proj

    y1 = _layer_norm(xf + attn, g1_ref[0], be1_ref[0])           # Add & LN (f32)

    hidden = jnp.maximum(
        jnp.dot(y1.astype(jnp.bfloat16), w1_ref[0],
                preferred_element_type=jnp.float32) + b1_ref[0], 0.0)
    ff = jnp.dot(hidden.astype(jnp.bfloat16), w2_ref[0],
                 preferred_element_type=jnp.float32) + b2_ref[0]
    y2 = _layer_norm(y1 + ff, g2_ref[0], be2_ref[0])             # Add & LN (f32)

    o_ref[...] = y2.reshape(Bt, S, E).astype(o_ref.dtype)


def output_layer_kernel(x_ref, w1_ref, b1_ref, w2_ref, b2_ref, o_ref, acc_ref):
    """OutputLayer: flatten -> fc_1 -> relu -> (dropout = identity) -> fc_2.

    The (S*E) contraction of fc_1 is tiled over the grid with an f32 accumulator.
    The classifier output is lane-padded to 128 columns (sliced in the wrapper).
    """
    @pl.when(pl.program_id(0) == 0)
    def _():
        acc_ref[...] = jnp.zeros_like(acc_ref)

    acc_ref[...] += jnp.dot(x_ref[...].astype(jnp.bfloat16), w1_ref[...],
                            preferred_element_type=jnp.float32)

    @pl.when(pl.program_id(0) == pl.num_programs(0) - 1)
    def _():
        h = jnp.maximum(acc_ref[...] + b1_ref[...], 0.0)
        o_ref[...] = (jnp.dot(h.astype(jnp.bfloat16), w2_ref[...],
                              preferred_element_type=jnp.float32)
                      + b2_ref[...]).astype(o_ref.dtype)


# ----------------------------- wrappers ------------------------------------ #

_ENC_PARAM_ORDER = ('wq', 'bq', 'wk', 'bk', 'wv', 'bv', 'wo', 'bo',
                    'w1', 'b1', 'w2', 'b2', 'g1', 'be1', 'g2', 'be2')


def _tpu_budget():
    """(vmem_limit_bytes, row_cap, force_two_batch_blocks) — generation-aware."""
    try:
        vmem_phys = int(pltpu.get_tpu_info().vmem_capacity_bytes)
    except Exception:
        vmem_phys = None
    if vmem_phys is not None and vmem_phys >= 100 * 1024 * 1024:
        # v5e / v6e: 128 MiB VMEM per TensorCore, single core -> big blocks.
        return 96 * 1024 * 1024, 1024, False
    if vmem_phys is not None:
        # v7x-class: 64 MiB per TensorCore, 2 TCs fed by the "parallel" axis.
        return 48 * 1024 * 1024, 256, True
    # Unknown hardware: conservative settings that are safe everywhere.
    return 48 * 1024 * 1024, 512, True


def _pick_block_b(B, S, row_cap, force_two_blocks):
    """Largest divisor of B with block_b*S <= row_cap (and >=2 blocks if forced)."""
    limit = B // 2 if (force_two_blocks and B >= 2) else B
    best = 1
    for d in range(1, max(limit, 1) + 1):
        if B % d == 0 and d * S <= row_cap:
            best = d
    return best


def bert_encoder_stack(x, bias, enc, heads, vmem_limit, row_cap, force_two_blocks):
    B, S, E = x.shape
    L = enc['wq'].shape[0]
    block_b = _pick_block_b(B, S, row_cap, force_two_blocks)
    nb = B // block_b
    weights = [enc[name] for name in _ENC_PARAM_ORDER]

    def _wspec(w):
        nd = w.ndim
        return pl.BlockSpec((1,) + w.shape[1:],
                            lambda b, l, _nd=nd: (l,) + (0,) * (_nd - 1))

    in_specs = [
        pl.BlockSpec((block_b, S, E), lambda b, l: (b, 0, 0)),   # input activations
        pl.BlockSpec((block_b, 1, S), lambda b, l: (b, 0, 0)),   # key-only mask bias
    ] + [_wspec(w) for w in weights]

    return pl.pallas_call(
        functools.partial(bert_encoder_kernel, heads=heads),
        out_shape=jax.ShapeDtypeStruct((B, S, E), x.dtype),
        grid=(nb, L),
        in_specs=in_specs,
        out_specs=pl.BlockSpec((block_b, S, E), lambda b, l: (b, 0, 0)),
        compiler_params=pltpu.CompilerParams(
            dimension_semantics=("parallel", "arbitrary"),
            vmem_limit_bytes=vmem_limit),
    )(x, bias, *weights)


def output_layer(x, out_params, vmem_limit):
    B, S, E = x.shape
    K = S * E
    x_flat = x.reshape(B, K)                         # Flatten (glue reshape)
    w1, b1 = out_params['w1'], out_params['b1']
    w2, b2 = out_params['w2'], out_params['b2']
    F = w1.shape[1]
    C = w2.shape[1]

    # Lane-dense classifier columns: pad num_classes up to a 128-lane multiple.
    Cp = ((C + 127) // 128) * 128
    if Cp != C:
        w2p = jnp.pad(w2, ((0, 0), (0, Cp - C)))
        b2p = jnp.pad(b2, ((0, 0), (0, Cp - C)))
    else:
        w2p, b2p = w2, b2

    # K tile: largest 128-multiple divisor of K (<= 2048) whose double-buffered
    # bf16 w1 tile stays well within the VMEM budget (this kernel is pure
    # w1-streaming bandwidth bound, so bigger tiles amortize per-step overhead).
    tk = K
    for cand in (2048, 1536, 1024, 768, 640, 512, 384, 256, 128):
        if cand <= K and K % cand == 0 and 2 * cand * F * 2 <= vmem_limit // 3:
            tk = cand
            break
    nk = K // tk

    out = pl.pallas_call(
        output_layer_kernel,
        out_shape=jax.ShapeDtypeStruct((B, Cp), jnp.float32),
        grid=(nk,),
        in_specs=[
            pl.BlockSpec((B, tk), lambda k: (0, k)),
            pl.BlockSpec((tk, F), lambda k: (k, 0)),
            pl.BlockSpec((1, F), lambda k: (0, 0)),
            pl.BlockSpec((F, Cp), lambda k: (0, 0)),
            pl.BlockSpec((1, Cp), lambda k: (0, 0)),
        ],
        out_specs=pl.BlockSpec((B, Cp), lambda k: (0, 0)),
        scratch_shapes=[pltpu.VMEM((B, F), jnp.float32)],
        compiler_params=pltpu.CompilerParams(
            dimension_semantics=("arbitrary",),
            vmem_limit_bytes=vmem_limit),
    )(x_flat, w1, b1, w2p, b2p)
    return out[:, :C]


def bert_forward(x, key_mask, params):
    """x: [B, S, E]; key_mask: [B, S] with 1 = attend, 0 = masked key."""
    vmem_limit, row_cap, force_two = _tpu_budget()
    B, S = key_mask.shape
    # Additive attention bias: 0 where mask==1, -1e9 where mask==0 (key-only).
    bias = ((key_mask.astype(jnp.float32) - 1.0) * jnp.float32(1e9)).reshape(B, 1, S)
    x = bert_encoder_stack(x, bias, params['encoders'], params['heads'],
                           vmem_limit, row_cap, force_two)
    return output_layer(x, params['output'], vmem_limit)


# --------------------------- parameter init -------------------------------- #

def _init_linear(key, fan_in, fan_out):
    k1, k2 = jax.random.split(key)
    w = jax.random.normal(k1, (fan_in, fan_out), jnp.float32) * 0.02
    b = jax.random.normal(k2, (1, fan_out), jnp.float32) * 0.02
    return w, b


def init_bert_params(key, embed_size, seq_len, heads, ff_hidden_size,
                     num_layers, num_classes=2):
    layers = []
    for _ in range(num_layers):
        keys = jax.random.split(key, 7)
        key = keys[0]
        wq, bq = _init_linear(keys[1], embed_size, embed_size)
        wk, bk = _init_linear(keys[2], embed_size, embed_size)
        wv, bv = _init_linear(keys[3], embed_size, embed_size)
        wo, bo = _init_linear(keys[4], embed_size, embed_size)
        w1, b1 = _init_linear(keys[5], embed_size, ff_hidden_size)
        w2, b2 = _init_linear(keys[6], ff_hidden_size, embed_size)
        layers.append(dict(
            wq=wq, bq=bq, wk=wk, bk=bk, wv=wv, bv=bv, wo=wo, bo=bo,
            w1=w1, b1=b1, w2=w2, b2=b2,
            g1=jnp.ones((1, embed_size), jnp.float32),
            be1=jnp.zeros((1, embed_size), jnp.float32),
            g2=jnp.ones((1, embed_size), jnp.float32),
            be2=jnp.zeros((1, embed_size), jnp.float32),
        ))

    # Stack per-layer params with a leading layer axis; cast matmul weights to
    # bf16 (MXU-native, half the DMA/VMEM); keep biases / LN params in f32.
    enc = {name: jnp.stack([lyr[name] for lyr in layers]) for name in _ENC_PARAM_ORDER}
    for name in ('wq', 'wk', 'wv', 'wo', 'w1', 'w2'):
        enc[name] = enc[name].astype(jnp.bfloat16)

    keys = jax.random.split(key, 3)
    ow1, ob1 = _init_linear(keys[1], embed_size * seq_len, ff_hidden_size)
    ow2, ob2 = _init_linear(keys[2], ff_hidden_size, num_classes)
    output = dict(w1=ow1.astype(jnp.bfloat16), b1=ob1,
                  w2=ow2.astype(jnp.bfloat16), b2=ob2)
    return {'heads': heads, 'encoders': enc, 'output': output}


# ------------------------------- main --------------------------------------- #

if __name__ == "__main__":
    batch, seq_len, embed_size = 2, 8, 32
    heads, ff_hidden_size, num_layers, num_classes = 4, 64, 2, 2

    root = jax.random.PRNGKey(0)
    k_x, k_p = jax.random.split(root)

    x = jax.random.normal(k_x, (batch, seq_len, embed_size), jnp.float32)
    # Key padding mask: attend everywhere except the last key position.
    mask = jnp.ones((batch, seq_len), jnp.float32).at[:, -1].set(0.0)

    params = init_bert_params(k_p, embed_size, seq_len, heads,
                              ff_hidden_size, num_layers, num_classes)

    logits = bert_forward(x, mask, params)
    jax.block_until_ready(logits)
    assert logits.shape == (batch, num_classes), logits.shape
    assert bool(jnp.all(jnp.isfinite(logits))), "non-finite logits"
    print("KERNEL_OK")
</pallas_src>

<mosaic_0001>
module attributes {stable_mosaic.version = 11 : i64} {
  func.func @bert_encoder_kernel(%arg0: i32, %arg1: i32, %arg2: memref<1x8x32xf32, #tpu.memory_space<vmem>>, %arg3: memref<1x1x8xf32, #tpu.memory_space<vmem>>, %arg4: memref<1x32x32xbf16, #tpu.memory_space<vmem>>, %arg5: memref<1x1x32xf32, #tpu.memory_space<vmem>>, %arg6: memref<1x32x32xbf16, #tpu.memory_space<vmem>>, %arg7: memref<1x1x32xf32, #tpu.memory_space<vmem>>, %arg8: memref<1x32x32xbf16, #tpu.memory_space<vmem>>, %arg9: memref<1x1x32xf32, #tpu.memory_space<vmem>>, %arg10: memref<1x32x32xbf16, #tpu.memory_space<vmem>>, %arg11: memref<1x1x32xf32, #tpu.memory_space<vmem>>, %arg12: memref<1x32x64xbf16, #tpu.memory_space<vmem>>, %arg13: memref<1x1x64xf32, #tpu.memory_space<vmem>>, %arg14: memref<1x64x32xbf16, #tpu.memory_space<vmem>>, %arg15: memref<1x1x32xf32, #tpu.memory_space<vmem>>, %arg16: memref<1x1x32xf32, #tpu.memory_space<vmem>>, %arg17: memref<1x1x32xf32, #tpu.memory_space<vmem>>, %arg18: memref<1x1x32xf32, #tpu.memory_space<vmem>>, %arg19: memref<1x1x32xf32, #tpu.memory_space<vmem>>, %arg20: memref<1x8x32xf32, #tpu.memory_space<vmem>>) attributes {dimension_semantics = [#tpu.dimension_semantics<parallel>, #tpu.dimension_semantics<arbitrary>], iteration_bounds = array<i64: 2, 2>, scalar_prefetch = 0 : i64, scratch_operands = 0 : i64, tpu.core_type = #tpu.core_type<tc>, window_params = [{transform_indices = @transform_0, window_bounds = array<i64: 1, 8, 32>}, {transform_indices = @transform_1, window_bounds = array<i64: 1, 1, 8>}, {transform_indices = @transform_2, window_bounds = array<i64: 1, 32, 32>}, {transform_indices = @transform_3, window_bounds = array<i64: 1, 1, 32>}, {transform_indices = @transform_4, window_bounds = array<i64: 1, 32, 32>}, {transform_indices = @transform_5, window_bounds = array<i64: 1, 1, 32>}, {transform_indices = @transform_6, window_bounds = array<i64: 1, 32, 32>}, {transform_indices = @transform_7, window_bounds = array<i64: 1, 1, 32>}, {transform_indices = @transform_8, window_bounds = array<i64: 1, 32, 32>}, {transform_indices = @transform_9, window_bounds = array<i64: 1, 1, 32>}, {transform_indices = @transform_10, window_bounds = array<i64: 1, 32, 64>}, {transform_indices = @transform_11, window_bounds = array<i64: 1, 1, 64>}, {transform_indices = @transform_12, window_bounds = array<i64: 1, 64, 32>}, {transform_indices = @transform_13, window_bounds = array<i64: 1, 1, 32>}, {transform_indices = @transform_14, window_bounds = array<i64: 1, 1, 32>}, {transform_indices = @transform_15, window_bounds = array<i64: 1, 1, 32>}, {transform_indices = @transform_16, window_bounds = array<i64: 1, 1, 32>}, {transform_indices = @transform_17, window_bounds = array<i64: 1, 1, 32>}, {transform_indices = @transform_18, window_bounds = array<i64: 1, 8, 32>}]} {
    %c0_i32 = arith.constant 0 : i32
    %0 = arith.cmpi eq, %arg1, %c0_i32 : i32
    %1 = arith.extui %0 : i1 to i32
    %c0_i32_0 = arith.constant 0 : i32
    %2 = arith.cmpi ne, %1, %c0_i32_0 : i32
    scf.if %2 {
      %c0_90 = arith.constant 0 : index
      %c0_91 = arith.constant 0 : index
      %c0_92 = arith.constant 0 : index
      %192 = vector.load %arg2[%c0_90, %c0_91, %c0_92] : memref<1x8x32xf32, #tpu.memory_space<vmem>>, vector<1x8x32xf32>
      %c0_93 = arith.constant 0 : index
      %c0_94 = arith.constant 0 : index
      %c0_95 = arith.constant 0 : index
      %193 = vector.load %arg20[%c0_93, %c0_94, %c0_95] : memref<1x8x32xf32, #tpu.memory_space<vmem>>, vector<1x8x32xf32>
      tpu.vector_store %arg20[%c0_93, %c0_94, %c0_95], %192 {strides = array<i32>} : memref<1x8x32xf32, #tpu.memory_space<vmem>>, vector<1x8x32xf32>,
    } else {
    }
    %c0 = arith.constant 0 : index
    %c0_1 = arith.constant 0 : index
    %c0_2 = arith.constant 0 : index
    %3 = vector.load %arg20[%c0, %c0_1, %c0_2] : memref<1x8x32xf32, #tpu.memory_space<vmem>>, vector<1x8x32xf32>
    %4 = vector.shape_cast %3 : vector<1x8x32xf32> to vector<8x32xf32>
    %5 = arith.truncf %4 : vector<8x32xf32> to vector<8x32xbf16>
    %c0_3 = arith.constant 0 : index
    %c0_4 = arith.constant 0 : index
    %c0_5 = arith.constant 0 : index
    %6 = vector.load %arg4[%c0_3, %c0_4, %c0_5] : memref<1x32x32xbf16, #tpu.memory_space<vmem>>, vector<1x32x32xbf16>
    %7 = vector.shape_cast %6 : vector<1x32x32xbf16> to vector<32x32xbf16>
    %c0_6 = arith.constant 0 : index
    %c0_7 = arith.constant 0 : index
    %c0_8 = arith.constant 0 : index
    %8 = vector.load %arg6[%c0_6, %c0_7, %c0_8] : memref<1x32x32xbf16, #tpu.memory_space<vmem>>, vector<1x32x32xbf16>
    %9 = vector.shape_cast %8 : vector<1x32x32xbf16> to vector<32x32xbf16>
    %c0_9 = arith.constant 0 : index
    %c0_10 = arith.constant 0 : index
    %c0_11 = arith.constant 0 : index
    %10 = vector.load %arg8[%c0_9, %c0_10, %c0_11] : memref<1x32x32xbf16, #tpu.memory_space<vmem>>, vector<1x32x32xbf16>
    %11 = vector.shape_cast %10 : vector<1x32x32xbf16> to vector<32x32xbf16>
    %c0_12 = arith.constant 0 : index
    %c0_13 = arith.constant 0 : index
    %c0_14 = arith.constant 0 : index
    %12 = vector.load %arg10[%c0_12, %c0_13, %c0_14] : memref<1x32x32xbf16, #tpu.memory_space<vmem>>, vector<1x32x32xbf16>
    %13 = vector.shape_cast %12 : vector<1x32x32xbf16> to vector<32x32xbf16>
    %c0_15 = arith.constant 0 : index
    %c0_16 = arith.constant 0 : index
    %c0_17 = arith.constant 0 : index
    %14 = vector.load %arg5[%c0_15, %c0_16, %c0_17] : memref<1x1x32xf32, #tpu.memory_space<vmem>>, vector<1x1x32xf32>
    %15 = vector.shape_cast %14 : vector<1x1x32xf32> to vector<1x32xf32>
    %c0_18 = arith.constant 0 : index
    %c0_19 = arith.constant 0 : index
    %c0_20 = arith.constant 0 : index
    %16 = vector.load %arg7[%c0_18, %c0_19, %c0_20] : memref<1x1x32xf32, #tpu.memory_space<vmem>>, vector<1x1x32xf32>
    %17 = vector.shape_cast %16 : vector<1x1x32xf32> to vector<1x32xf32>
    %c0_21 = arith.constant 0 : index
    %c0_22 = arith.constant 0 : index
    %c0_23 = arith.constant 0 : index
    %18 = vector.load %arg9[%c0_21, %c0_22, %c0_23] : memref<1x1x32xf32, #tpu.memory_space<vmem>>, vector<1x1x32xf32>
    %19 = vector.shape_cast %18 : vector<1x1x32xf32> to vector<1x32xf32>
    %c0_24 = arith.constant 0 : index
    %c0_25 = arith.constant 0 : index
    %c0_26 = arith.constant 0 : index
    %20 = vector.load %arg11[%c0_24, %c0_25, %c0_26] : memref<1x1x32xf32, #tpu.memory_space<vmem>>, vector<1x1x32xf32>
    %21 = vector.shape_cast %20 : vector<1x1x32xf32> to vector<1x32xf32>
    %cst = arith.constant dense<0.000000e+00> : vector<8x32xf32>
    %22 = tpu.matmul %5, %7, %cst {dimension_numbers = #tpu.dot_dimension_numbers<[1], [0], [0], [1], [0, 0, 1, 1], [], []>} : vector<8x32xbf16>, vector<32x32xbf16>, vector<8x32xf32> -> vector<8x32xf32>
    %23 = vector.broadcast %15 : vector<1x32xf32> to vector<8x32xf32>
    %24 = arith.addf %22, %23 : vector<8x32xf32>
    %cst_27 = arith.constant dense<0.000000e+00> : vector<8x32xf32>
    %25 = tpu.matmul %5, %9, %cst_27 {dimension_numbers = #tpu.dot_dimension_numbers<[1], [0], [0], [1], [0, 0, 1, 1], [], []>} : vector<8x32xbf16>, vector<32x32xbf16>, vector<8x32xf32> -> vector<8x32xf32>
    %26 = vector.broadcast %17 : vector<1x32xf32> to vector<8x32xf32>
    %27 = arith.addf %25, %26 : vector<8x32xf32>
    %cst_28 = arith.constant dense<0.000000e+00> : vector<8x32xf32>
    %28 = tpu.matmul %5, %11, %cst_28 {dimension_numbers = #tpu.dot_dimension_numbers<[1], [0], [0], [1], [0, 0, 1, 1], [], []>} : vector<8x32xbf16>, vector<32x32xbf16>, vector<8x32xf32> -> vector<8x32xf32>
    %29 = vector.broadcast %19 : vector<1x32xf32> to vector<8x32xf32>
    %30 = arith.addf %28, %29 : vector<8x32xf32>
    %cst_29 = arith.constant 0.353553385 : f32
    %31 = vector.broadcast %cst_29 : f32 to vector<8x32xf32>
    %32 = arith.mulf %24, %31 : vector<8x32xf32>
    %33 = vector.shape_cast %32 : vector<8x32xf32> to vector<1x8x32xf32>
    %34 = arith.truncf %33 : vector<1x8x32xf32> to vector<1x8x32xbf16>
    %35 = vector.shape_cast %27 : vector<8x32xf32> to vector<1x8x32xf32>
    %36 = arith.truncf %35 : vector<1x8x32xf32> to vector<1x8x32xbf16>
    %37 = vector.shape_cast %30 : vector<8x32xf32> to vector<1x8x32xf32>
    %38 = arith.truncf %37 : vector<1x8x32xf32> to vector<1x8x32xbf16>
    %c0_30 = arith.constant 0 : index
    %c0_31 = arith.constant 0 : index
    %c0_32 = arith.constant 0 : index
    %39 = vector.load %arg3[%c0_30, %c0_31, %c0_32] : memref<1x1x8xf32, #tpu.memory_space<vmem>>, vector<1x1x8xf32>
    %40 = vector.extract_strided_slice %34 {offsets = [0, 0, 0], sizes = [1, 8, 8], strides = [1, 1, 1]} : vector<1x8x32xbf16> to vector<1x8x8xbf16>
    %41 = vector.extract_strided_slice %36 {offsets = [0, 0, 0], sizes = [1, 8, 8], strides = [1, 1, 1]} : vector<1x8x32xbf16> to vector<1x8x8xbf16>
    "tpu.trace_start"() <{level = 10 : i32, message = "bqd,bkd->bqk"}> : () -> ()
    %cst_33 = arith.constant dense<0.000000e+00> : vector<1x8x8xf32>
    %42 = tpu.matmul %40, %41, %cst_33 {dimension_numbers = #tpu.dot_dimension_numbers<[2], [2], [1], [1], [0, 0, 0, 1, 1, 1], [0], [0]>} : vector<1x8x8xbf16>, vector<1x8x8xbf16>, vector<1x8x8xf32> -> vector<1x8x8xf32>
    "tpu.trace_stop"() : () -> ()
    %43 = vector.broadcast %39 : vector<1x1x8xf32> to vector<1x8x8xf32>
    %44 = arith.addf %42, %43 : vector<1x8x8xf32>
    %cst_34 = arith.constant dense<0xFF800000> : vector<1x8xf32>
    %45 = vector.multi_reduction <maximumf>, %44, %cst_34 [2] : vector<1x8x8xf32> to vector<1x8xf32>
    %46 = vector.shape_cast %45 : vector<1x8xf32> to vector<1x8x1xf32>
    %47 = vector.broadcast %46 : vector<1x8x1xf32> to vector<1x8x8xf32>
    %48 = arith.subf %44, %47 : vector<1x8x8xf32>
    %49 = math.exp %48 : vector<1x8x8xf32>
    %cst_35 = arith.constant dense<0.000000e+00> : vector<1x8xf32>
    %50 = vector.multi_reduction <add>, %49, %cst_35 [2] : vector<1x8x8xf32> to vector<1x8xf32>
    %51 = vector.shape_cast %50 : vector<1x8xf32> to vector<1x8x1xf32>
    %52 = tpu.reciprocal %51 {approx = true} : vector<1x8x1xf32> -> vector<1x8x1xf32>
    %53 = arith.truncf %49 : vector<1x8x8xf32> to vector<1x8x8xbf16>
    %54 = vector.extract_strided_slice %38 {offsets = [0, 0, 0], sizes = [1, 8, 8], strides = [1, 1, 1]} : vector<1x8x32xbf16> to vector<1x8x8xbf16>
    "tpu.trace_start"() <{level = 10 : i32, message = "bqk,bkd->bqd"}> : () -> ()
    %cst_36 = arith.constant dense<0.000000e+00> : vector<1x8x8xf32>
    %55 = tpu.matmul %53, %54, %cst_36 {dimension_numbers = #tpu.dot_dimension_numbers<[2], [1], [1], [2], [0, 0, 0, 1, 1, 2], [0], [0]>} : vector<1x8x8xbf16>, vector<1x8x8xbf16>, vector<1x8x8xf32> -> vector<1x8x8xf32>
    "tpu.trace_stop"() : () -> ()
    %56 = vector.broadcast %52 : vector<1x8x1xf32> to vector<1x8x8xf32>
    %57 = arith.mulf %55, %56 : vector<1x8x8xf32>
    %58 = vector.extract_strided_slice %34 {offsets = [0, 0, 8], sizes = [1, 8, 8], strides = [1, 1, 1]} : vector<1x8x32xbf16> to vector<1x8x8xbf16>
    %59 = vector.extract_strided_slice %36 {offsets = [0, 0, 8], sizes = [1, 8, 8], strides = [1, 1, 1]} : vector<1x8x32xbf16> to vector<1x8x8xbf16>
    "tpu.trace_start"() <{level = 10 : i32, message = "bqd,bkd->bqk"}> : () -> ()
    %cst_37 = arith.constant dense<0.000000e+00> : vector<1x8x8xf32>
    %60 = tpu.matmul %58, %59, %cst_37 {dimension_numbers = #tpu.dot_dimension_numbers<[2], [2], [1], [1], [0, 0, 0, 1, 1, 1], [0], [0]>} : vector<1x8x8xbf16>, vector<1x8x8xbf16>, vector<1x8x8xf32> -> vector<1x8x8xf32>
    "tpu.trace_stop"() : () -> ()
    %61 = vector.broadcast %39 : vector<1x1x8xf32> to vector<1x8x8xf32>
    %62 = arith.addf %60, %61 : vector<1x8x8xf32>
    %cst_38 = arith.constant dense<0xFF800000> : vector<1x8xf32>
    %63 = vector.multi_reduction <maximumf>, %62, %cst_38 [2] : vector<1x8x8xf32> to vector<1x8xf32>
    %64 = vector.shape_cast %63 : vector<1x8xf32> to vector<1x8x1xf32>
    %65 = vector.broadcast %64 : vector<1x8x1xf32> to vector<1x8x8xf32>
    %66 = arith.subf %62, %65 : vector<1x8x8xf32>
    %67 = math.exp %66 : vector<1x8x8xf32>
    %cst_39 = arith.constant dense<0.000000e+00> : vector<1x8xf32>
    %68 = vector.multi_reduction <add>, %67, %cst_39 [2] : vector<1x8x8xf32> to vector<1x8xf32>
    %69 = vector.shape_cast %68 : vector<1x8xf32> to vector<1x8x1xf32>
    %70 = tpu.reciprocal %69 {approx = true} : vector<1x8x1xf32> -> vector<1x8x1xf32>
    %71 = arith.truncf %67 : vector<1x8x8xf32> to vector<1x8x8xbf16>
    %72 = vector.extract_strided_slice %38 {offsets = [0, 0, 8], sizes = [1, 8, 8], strides = [1, 1, 1]} : vector<1x8x32xbf16> to vector<1x8x8xbf16>
    "tpu.trace_start"() <{level = 10 : i32, message = "bqk,bkd->bqd"}> : () -> ()
    %cst_40 = arith.constant dense<0.000000e+00> : vector<1x8x8xf32>
    %73 = tpu.matmul %71, %72, %cst_40 {dimension_numbers = #tpu.dot_dimension_numbers<[2], [1], [1], [2], [0, 0, 0, 1, 1, 2], [0], [0]>} : vector<1x8x8xbf16>, vector<1x8x8xbf16>, vector<1x8x8xf32> -> vector<1x8x8xf32>
    "tpu.trace_stop"() : () -> ()
    %74 = vector.broadcast %70 : vector<1x8x1xf32> to vector<1x8x8xf32>
    %75 = arith.mulf %73, %74 : vector<1x8x8xf32>
    %76 = vector.extract_strided_slice %34 {offsets = [0, 0, 16], sizes = [1, 8, 8], strides = [1, 1, 1]} : vector<1x8x32xbf16> to vector<1x8x8xbf16>
    %77 = vector.extract_strided_slice %36 {offsets = [0, 0, 16], sizes = [1, 8, 8], strides = [1, 1, 1]} : vector<1x8x32xbf16> to vector<1x8x8xbf16>
    "tpu.trace_start"() <{level = 10 : i32, message = "bqd,bkd->bqk"}> : () -> ()
    %cst_41 = arith.constant dense<0.000000e+00> : vector<1x8x8xf32>
    %78 = tpu.matmul %76, %77, %cst_41 {dimension_numbers = #tpu.dot_dimension_numbers<[2], [2], [1], [1], [0, 0, 0, 1, 1, 1], [0], [0]>} : vector<1x8x8xbf16>, vector<1x8x8xbf16>, vector<1x8x8xf32> -> vector<1x8x8xf32>
    "tpu.trace_stop"() : () -> ()
    %79 = vector.broadcast %39 : vector<1x1x8xf32> to vector<1x8x8xf32>
    %80 = arith.addf %78, %79 : vector<1x8x8xf32>
    %cst_42 = arith.constant dense<0xFF800000> : vector<1x8xf32>
    %81 = vector.multi_reduction <maximumf>, %80, %cst_42 [2] : vector<1x8x8xf32> to vector<1x8xf32>
    %82 = vector.shape_cast %81 : vector<1x8xf32> to vector<1x8x1xf32>
    %83 = vector.broadcast %82 : vector<1x8x1xf32> to vector<1x8x8xf32>
    %84 = arith.subf %80, %83 : vector<1x8x8xf32>
    %85 = math.exp %84 : vector<1x8x8xf32>
    %cst_43 = arith.constant dense<0.000000e+00> : vector<1x8xf32>
    %86 = vector.multi_reduction <add>, %85, %cst_43 [2] : vector<1x8x8xf32> to vector<1x8xf32>
    %87 = vector.shape_cast %86 : vector<1x8xf32> to vector<1x8x1xf32>
    %88 = tpu.reciprocal %87 {approx = true} : vector<1x8x1xf32> -> vector<1x8x1xf32>
    %89 = arith.truncf %85 : vector<1x8x8xf32> to vector<1x8x8xbf16>
    %90 = vector.extract_strided_slice %38 {offsets = [0, 0, 16], sizes = [1, 8, 8], strides = [1, 1, 1]} : vector<1x8x32xbf16> to vector<1x8x8xbf16>
    "tpu.trace_start"() <{level = 10 : i32, message = "bqk,bkd->bqd"}> : () -> ()
    %cst_44 = arith.constant dense<0.000000e+00> : vector<1x8x8xf32>
    %91 = tpu.matmul %89, %90, %cst_44 {dimension_numbers = #tpu.dot_dimension_numbers<[2], [1], [1], [2], [0, 0, 0, 1, 1, 2], [0], [0]>} : vector<1x8x8xbf16>, vector<1x8x8xbf16>, vector<1x8x8xf32> -> vector<1x8x8xf32>
    "tpu.trace_stop"() : () -> ()
    %92 = vector.broadcast %88 : vector<1x8x1xf32> to vector<1x8x8xf32>
    %93 = arith.mulf %91, %92 : vector<1x8x8xf32>
    %94 = vector.extract_strided_slice %34 {offsets = [0, 0, 24], sizes = [1, 8, 8], strides = [1, 1, 1]} : vector<1x8x32xbf16> to vector<1x8x8xbf16>
    %95 = vector.extract_strided_slice %36 {offsets = [0, 0, 24], sizes = [1, 8, 8], strides = [1, 1, 1]} : vector<1x8x32xbf16> to vector<1x8x8xbf16>
    "tpu.trace_start"() <{level = 10 : i32, message = "bqd,bkd->bqk"}> : () -> ()
    %cst_45 = arith.constant dense<0.000000e+00> : vector<1x8x8xf32>
    %96 = tpu.matmul %94, %95, %cst_45 {dimension_numbers = #tpu.dot_dimension_numbers<[2], [2], [1], [1], [0, 0, 0, 1, 1, 1], [0], [0]>} : vector<1x8x8xbf16>, vector<1x8x8xbf16>, vector<1x8x8xf32> -> vector<1x8x8xf32>
    "tpu.trace_stop"() : () -> ()
    %97 = vector.broadcast %39 : vector<1x1x8xf32> to vector<1x8x8xf32>
    %98 = arith.addf %96, %97 : vector<1x8x8xf32>
    %cst_46 = arith.constant dense<0xFF800000> : vector<1x8xf32>
    %99 = vector.multi_reduction <maximumf>, %98, %cst_46 [2] : vector<1x8x8xf32> to vector<1x8xf32>
    %100 = vector.shape_cast %99 : vector<1x8xf32> to vector<1x8x1xf32>
    %101 = vector.broadcast %100 : vector<1x8x1xf32> to vector<1x8x8xf32>
    %102 = arith.subf %98, %101 : vector<1x8x8xf32>
    %103 = math.exp %102 : vector<1x8x8xf32>
    %cst_47 = arith.constant dense<0.000000e+00> : vector<1x8xf32>
    %104 = vector.multi_reduction <add>, %103, %cst_47 [2] : vector<1x8x8xf32> to vector<1x8xf32>
    %105 = vector.shape_cast %104 : vector<1x8xf32> to vector<1x8x1xf32>
    %106 = tpu.reciprocal %105 {approx = true} : vector<1x8x1xf32> -> vector<1x8x1xf32>
    %107 = arith.truncf %103 : vector<1x8x8xf32> to vector<1x8x8xbf16>
    %108 = vector.extract_strided_slice %38 {offsets = [0, 0, 24], sizes = [1, 8, 8], strides = [1, 1, 1]} : vector<1x8x32xbf16> to vector<1x8x8xbf16>
    "tpu.trace_start"() <{level = 10 : i32, message = "bqk,bkd->bqd"}> : () -> ()
    %cst_48 = arith.constant dense<0.000000e+00> : vector<1x8x8xf32>
    %109 = tpu.matmul %107, %108, %cst_48 {dimension_numbers = #tpu.dot_dimension_numbers<[2], [1], [1], [2], [0, 0, 0, 1, 1, 2], [0], [0]>} : vector<1x8x8xbf16>, vector<1x8x8xbf16>, vector<1x8x8xf32> -> vector<1x8x8xf32>
    "tpu.trace_stop"() : () -> ()
    %110 = vector.broadcast %106 : vector<1x8x1xf32> to vector<1x8x8xf32>
    %111 = arith.mulf %109, %110 : vector<1x8x8xf32>
    %112 = tpu.concatenate %57, %75, %93, %111 in 2 : vector<1x8x8xf32>, vector<1x8x8xf32>, vector<1x8x8xf32>, vector<1x8x8xf32> -> vector<1x8x32xf32>
    %113 = vector.shape_cast %112 : vector<1x8x32xf32> to vector<8x32xf32>
    %114 = arith.truncf %113 : vector<8x32xf32> to vector<8x32xbf16>
    %cst_49 = arith.constant dense<0.000000e+00> : vector<8x32xf32>
    %115 = tpu.matmul %114, %13, %cst_49 {dimension_numbers = #tpu.dot_dimension_numbers<[1], [0], [0], [1], [0, 0, 1, 1], [], []>} : vector<8x32xbf16>, vector<32x32xbf16>, vector<8x32xf32> -> vector<8x32xf32>
    %116 = vector.broadcast %21 : vector<1x32xf32> to vector<8x32xf32>
    %117 = arith.addf %115, %116 : vector<8x32xf32>
    %118 = arith.addf %4, %117 : vector<8x32xf32>
    %c0_50 = arith.constant 0 : index
    %c0_51 = arith.constant 0 : index
    %c0_52 = arith.constant 0 : index
    %119 = vector.load %arg16[%c0_50, %c0_51, %c0_52] : memref<1x1x32xf32, #tpu.memory_space<vmem>>, vector<1x1x32xf32>
    %120 = vector.shape_cast %119 : vector<1x1x32xf32> to vector<1x32xf32>
    %c0_53 = arith.constant 0 : index
    %c0_54 = arith.constant 0 : index
    %c0_55 = arith.constant 0 : index
    %121 = vector.load %arg17[%c0_53, %c0_54, %c0_55] : memref<1x1x32xf32, #tpu.memory_space<vmem>>, vector<1x1x32xf32>
    %122 = vector.shape_cast %121 : vector<1x1x32xf32> to vector<1x32xf32>
    %cst_56 = arith.constant dense<0.000000e+00> : vector<8xf32>
    %123 = vector.multi_reduction <add>, %118, %cst_56 [1] : vector<8x32xf32> to vector<8xf32>
    %124 = vector.shape_cast %123 : vector<8xf32> to vector<8x1xf32>
    %cst_57 = arith.constant 3.200000e+01 : f32
    %125 = vector.broadcast %cst_57 : f32 to vector<8x1xf32>
    %126 = arith.divf %124, %125 : vector<8x1xf32>
    %127 = vector.broadcast %126 : vector<8x1xf32> to vector<8x32xf32>
    %128 = arith.subf %118, %127 : vector<8x32xf32>
    %129 = arith.mulf %128, %128 : vector<8x32xf32>
    %cst_58 = arith.constant dense<0.000000e+00> : vector<8xf32>
    %130 = vector.multi_reduction <add>, %129, %cst_58 [1] : vector<8x32xf32> to vector<8xf32>
    %131 = vector.shape_cast %130 : vector<8xf32> to vector<8x1xf32>
    %cst_59 = arith.constant 3.200000e+01 : f32
    %132 = vector.broadcast %cst_59 : f32 to vector<8x1xf32>
    %133 = arith.divf %131, %132 : vector<8x1xf32>
    %134 = vector.broadcast %126 : vector<8x1xf32> to vector<8x32xf32>
    %135 = arith.subf %118, %134 : vector<8x32xf32>
    %cst_60 = arith.constant 9.99999974E-6 : f32
    %136 = vector.broadcast %cst_60 : f32 to vector<8x1xf32>
    %137 = arith.addf %133, %136 : vector<8x1xf32>
    %138 = math.rsqrt %137 : vector<8x1xf32>
    %139 = vector.broadcast %138 : vector<8x1xf32> to vector<8x32xf32>
    %140 = arith.mulf %135, %139 : vector<8x32xf32>
    %141 = vector.broadcast %120 : vector<1x32xf32> to vector<8x32xf32>
    %142 = arith.mulf %140, %141 : vector<8x32xf32>
    %143 = vector.broadcast %122 : vector<1x32xf32> to vector<8x32xf32>
    %144 = arith.addf %142, %143 : vector<8x32xf32>
    %145 = arith.truncf %144 : vector<8x32xf32> to vector<8x32xbf16>
    %c0_61 = arith.constant 0 : index
    %c0_62 = arith.constant 0 : index
    %c0_63 = arith.constant 0 : index
    %146 = vector.load %arg12[%c0_61, %c0_62, %c0_63] : memref<1x32x64xbf16, #tpu.memory_space<vmem>>, vector<1x32x64xbf16>
    %147 = vector.shape_cast %146 : vector<1x32x64xbf16> to vector<32x64xbf16>
    %cst_64 = arith.constant dense<0.000000e+00> : vector<8x64xf32>
    %148 = tpu.matmul %145, %147, %cst_64 {dimension_numbers = #tpu.dot_dimension_numbers<[1], [0], [0], [1], [0, 0, 1, 1], [], []>} : vector<8x32xbf16>, vector<32x64xbf16>, vector<8x64xf32> -> vector<8x64xf32>
    %c0_65 = arith.constant 0 : index
    %c0_66 = arith.constant 0 : index
    %c0_67 = arith.constant 0 : index
    %149 = vector.load %arg13[%c0_65, %c0_66, %c0_67] : memref<1x1x64xf32, #tpu.memory_space<vmem>>, vector<1x1x64xf32>
    %150 = vector.shape_cast %149 : vector<1x1x64xf32> to vector<1x64xf32>
    %151 = vector.broadcast %150 : vector<1x64xf32> to vector<8x64xf32>
    %152 = arith.addf %148, %151 : vector<8x64xf32>
    %cst_68 = arith.constant 0.000000e+00 : f32
    %153 = vector.broadcast %cst_68 : f32 to vector<8x64xf32>
    %154 = arith.maximumf %152, %153 : vector<8x64xf32>
    %155 = arith.truncf %154 : vector<8x64xf32> to vector<8x64xbf16>
    %c0_69 = arith.constant 0 : index
    %c0_70 = arith.constant 0 : index
    %c0_71 = arith.constant 0 : index
    %156 = vector.load %arg14[%c0_69, %c0_70, %c0_71] : memref<1x64x32xbf16, #tpu.memory_space<vmem>>, vector<1x64x32xbf16>
    %157 = vector.shape_cast %156 : vector<1x64x32xbf16> to vector<64x32xbf16>
    %cst_72 = arith.constant dense<0.000000e+00> : vector<8x32xf32>
    %158 = tpu.matmul %155, %157, %cst_72 {dimension_numbers = #tpu.dot_dimension_numbers<[1], [0], [0], [1], [0, 0, 1, 1], [], []>} : vector<8x64xbf16>, vector<64x32xbf16>, vector<8x32xf32> -> vector<8x32xf32>
    %c0_73 = arith.constant 0 : index
    %c0_74 = arith.constant 0 : index
    %c0_75 = arith.constant 0 : index
    %159 = vector.load %arg15[%c0_73, %c0_74, %c0_75] : memref<1x1x32xf32, #tpu.memory_space<vmem>>, vector<1x1x32xf32>
    %160 = vector.shape_cast %159 : vector<1x1x32xf32> to vector<1x32xf32>
    %161 = vector.broadcast %160 : vector<1x32xf32> to vector<8x32xf32>
    %162 = arith.addf %158, %161 : vector<8x32xf32>
    %163 = arith.addf %144, %162 : vector<8x32xf32>
    %c0_76 = arith.constant 0 : index
    %c0_77 = arith.constant 0 : index
    %c0_78 = arith.constant 0 : index
    %164 = vector.load %arg18[%c0_76, %c0_77, %c0_78] : memref<1x1x32xf32, #tpu.memory_space<vmem>>, vector<1x1x32xf32>
    %165 = vector.shape_cast %164 : vector<1x1x32xf32> to vector<1x32xf32>
    %c0_79 = arith.constant 0 : index
    %c0_80 = arith.constant 0 : index
    %c0_81 = arith.constant 0 : index
    %166 = vector.load %arg19[%c0_79, %c0_80, %c0_81] : memref<1x1x32xf32, #tpu.memory_space<vmem>>, vector<1x1x32xf32>
    %167 = vector.shape_cast %166 : vector<1x1x32xf32> to vector<1x32xf32>
    %cst_82 = arith.constant dense<0.000000e+00> : vector<8xf32>
    %168 = vector.multi_reduction <add>, %163, %cst_82 [1] : vector<8x32xf32> to vector<8xf32>
    %169 = vector.shape_cast %168 : vector<8xf32> to vector<8x1xf32>
    %cst_83 = arith.constant 3.200000e+01 : f32
    %170 = vector.broadcast %cst_83 : f32 to vector<8x1xf32>
    %171 = arith.divf %169, %170 : vector<8x1xf32>
    %172 = vector.broadcast %171 : vector<8x1xf32> to vector<8x32xf32>
    %173 = arith.subf %163, %172 : vector<8x32xf32>
    %174 = arith.mulf %173, %173 : vector<8x32xf32>
    %cst_84 = arith.constant dense<0.000000e+00> : vector<8xf32>
    %175 = vector.multi_reduction <add>, %174, %cst_84 [1] : vector<8x32xf32> to vector<8xf32>
    %176 = vector.shape_cast %175 : vector<8xf32> to vector<8x1xf32>
    %cst_85 = arith.constant 3.200000e+01 : f32
    %177 = vector.broadcast %cst_85 : f32 to vector<8x1xf32>
    %178 = arith.divf %176, %177 : vector<8x1xf32>
    %179 = vector.broadcast %171 : vector<8x1xf32> to vector<8x32xf32>
    %180 = arith.subf %163, %179 : vector<8x32xf32>
    %cst_86 = arith.constant 9.99999974E-6 : f32
    %181 = vector.broadcast %cst_86 : f32 to vector<8x1xf32>
    %182 = arith.addf %178, %181 : vector<8x1xf32>
    %183 = math.rsqrt %182 : vector<8x1xf32>
    %184 = vector.broadcast %183 : vector<8x1xf32> to vector<8x32xf32>
    %185 = arith.mulf %180, %184 : vector<8x32xf32>
    %186 = vector.broadcast %165 : vector<1x32xf32> to vector<8x32xf32>
    %187 = arith.mulf %185, %186 : vector<8x32xf32>
    %188 = vector.broadcast %167 : vector<1x32xf32> to vector<8x32xf32>
    %189 = arith.addf %187, %188 : vector<8x32xf32>
    %190 = vector.shape_cast %189 : vector<8x32xf32> to vector<1x8x32xf32>
    %c0_87 = arith.constant 0 : index
    %c0_88 = arith.constant 0 : index
    %c0_89 = arith.constant 0 : index
    %191 = vector.load %arg20[%c0_87, %c0_88, %c0_89] : memref<1x8x32xf32, #tpu.memory_space<vmem>>, vector<1x8x32xf32>
    tpu.vector_store %arg20[%c0_87, %c0_88, %c0_89], %190 {strides = array<i32>} : memref<1x8x32xf32, #tpu.memory_space<vmem>>, vector<1x8x32xf32>,
    return
  }
  func.func @transform_0(%arg0: i32, %arg1: i32) -> (i32, i32, i32) {
    %c0_i32 = arith.constant 0 : i32
    %c0_i32_0 = arith.constant 0 : i32
    %c0_i32_1 = arith.constant 0 : i32
    return %arg0, %c0_i32, %c0_i32_0 : i32, i32, i32
  }
  func.func @transform_1(%arg0: i32, %arg1: i32) -> (i32, i32, i32) {
    %c0_i32 = arith.constant 0 : i32
    %c0_i32_0 = arith.constant 0 : i32
    %c0_i32_1 = arith.constant 0 : i32
    return %arg0, %c0_i32, %c0_i32_0 : i32, i32, i32
  }
  func.func @transform_2(%arg0: i32, %arg1: i32) -> (i32, i32, i32) {
    %c0_i32 = arith.constant 0 : i32
    %c0_i32_0 = arith.constant 0 : i32
    %c0_i32_1 = arith.constant 0 : i32
    return %arg1, %c0_i32, %c0_i32_0 : i32, i32, i32
  }
  func.func @transform_3(%arg0: i32, %arg1: i32) -> (i32, i32, i32) {
    %c0_i32 = arith.constant 0 : i32
    %c0_i32_0 = arith.constant 0 : i32
    %c0_i32_1 = arith.constant 0 : i32
    return %arg1, %c0_i32, %c0_i32_0 : i32, i32, i32
  }
  func.func @transform_4(%arg0: i32, %arg1: i32) -> (i32, i32, i32) {
    %c0_i32 = arith.constant 0 : i32
    %c0_i32_0 = arith.constant 0 : i32
    %c0_i32_1 = arith.constant 0 : i32
    return %arg1, %c0_i32, %c0_i32_0 : i32, i32, i32
  }
  func.func @transform_5(%arg0: i32, %arg1: i32) -> (i32, i32, i32) {
    %c0_i32 = arith.constant 0 : i32
    %c0_i32_0 = arith.constant 0 : i32
    %c0_i32_1 = arith.constant 0 : i32
    return %arg1, %c0_i32, %c0_i32_0 : i32, i32, i32
  }
  func.func @transform_6(%arg0: i32, %arg1: i32) -> (i32, i32, i32) {
    %c0_i32 = arith.constant 0 : i32
    %c0_i32_0 = arith.constant 0 : i32
    %c0_i32_1 = arith.constant 0 : i32
    return %arg1, %c0_i32, %c0_i32_0 : i32, i32, i32
  }
  func.func @transform_7(%arg0: i32, %arg1: i32) -> (i32, i32, i32) {
    %c0_i32 = arith.constant 0 : i32
    %c0_i32_0 = arith.constant 0 : i32
    %c0_i32_1 = arith.constant 0 : i32
    return %arg1, %c0_i32, %c0_i32_0 : i32, i32, i32
  }
  func.func @transform_8(%arg0: i32, %arg1: i32) -> (i32, i32, i32) {
    %c0_i32 = arith.constant 0 : i32
    %c0_i32_0 = arith.constant 0 : i32
    %c0_i32_1 = arith.constant 0 : i32
    return %arg1, %c0_i32, %c0_i32_0 : i32, i32, i32
  }
  func.func @transform_9(%arg0: i32, %arg1: i32) -> (i32, i32, i32) {
    %c0_i32 = arith.constant 0 : i32
    %c0_i32_0 = arith.constant 0 : i32
    %c0_i32_1 = arith.constant 0 : i32
    return %arg1, %c0_i32, %c0_i32_0 : i32, i32, i32
  }
  func.func @transform_10(%arg0: i32, %arg1: i32) -> (i32, i32, i32) {
    %c0_i32 = arith.constant 0 : i32
    %c0_i32_0 = arith.constant 0 : i32
    %c0_i32_1 = arith.constant 0 : i32
    return %arg1, %c0_i32, %c0_i32_0 : i32, i32, i32
  }
  func.func @transform_11(%arg0: i32, %arg1: i32) -> (i32, i32, i32) {
    %c0_i32 = arith.constant 0 : i32
    %c0_i32_0 = arith.constant 0 : i32
    %c0_i32_1 = arith.constant 0 : i32
    return %arg1, %c0_i32, %c0_i32_0 : i32, i32, i32
  }
  func.func @transform_12(%arg0: i32, %arg1: i32) -> (i32, i32, i32) {
    %c0_i32 = arith.constant 0 : i32
    %c0_i32_0 = arith.constant 0 : i32
    %c0_i32_1 = arith.constant 0 : i32
    return %arg1, %c0_i32, %c0_i32_0 : i32, i32, i32
  }
  func.func @transform_13(%arg0: i32, %arg1: i32) -> (i32, i32, i32) {
    %c0_i32 = arith.constant 0 : i32
    %c0_i32_0 = arith.constant 0 : i32
    %c0_i32_1 = arith.constant 0 : i32
    return %arg1, %c0_i32, %c0_i32_0 : i32, i32, i32
  }
  func.func @transform_14(%arg0: i32, %arg1: i32) -> (i32, i32, i32) {
    %c0_i32 = arith.constant 0 : i32
    %c0_i32_0 = arith.constant 0 : i32
    %c0_i32_1 = arith.constant 0 : i32
    return %arg1, %c0_i32, %c0_i32_0 : i32, i32, i32
  }
  func.func @transform_15(%arg0: i32, %arg1: i32) -> (i32, i32, i32) {
    %c0_i32 = arith.constant 0 : i32
    %c0_i32_0 = arith.constant 0 : i32
    %c0_i32_1 = arith.constant 0 : i32
    return %arg1, %c0_i32, %c0_i32_0 : i32, i32, i32
  }
  func.func @transform_16(%arg0: i32, %arg1: i32) -> (i32, i32, i32) {
    %c0_i32 = arith.constant 0 : i32
    %c0_i32_0 = arith.constant 0 : i32
    %c0_i32_1 = arith.constant 0 : i32
    return %arg1, %c0_i32, %c0_i32_0 : i32, i32, i32
  }
  func.func @transform_17(%arg0: i32, %arg1: i32) -> (i32, i32, i32) {
    %c0_i32 = arith.constant 0 : i32
    %c0_i32_0 = arith.constant 0 : i32
    %c0_i32_1 = arith.constant 0 : i32
    return %arg1, %c0_i32, %c0_i32_0 : i32, i32, i32
  }
  func.func @transform_18(%arg0: i32, %arg1: i32) -> (i32, i32, i32) {
    %c0_i32 = arith.constant 0 : i32
    %c0_i32_0 = arith.constant 0 : i32
    %c0_i32_1 = arith.constant 0 : i32
    return %arg0, %c0_i32, %c0_i32_0 : i32, i32, i32
  }
}

</mosaic_0001>

<llo_original>
// kernel: tpu_custom_call.1
$region0: #{tpu_custom_call.1}
  #allocation0 [shape = 'u32[]', space=smem, size = 0x4, offset = 0x4, fixed_abs, tag = 'smem constant byte address 0x4 - core index']
  #allocation1 [shape = 'u32[72,128]{1,0:T(1,128)}', space=vmem, size = 0x9000, scoped, tag = 'internal scratch']
  %s0 = inlined_call_operand.hbm [shape: f32[2,8,32], index: 0, kind: input, shape index: {}]
  %s1 = inlined_call_operand.hbm [shape: f32[2,1,8], index: 1, kind: input, shape index: {}]
  %s2 = inlined_call_operand.vmem [shape: bf16[2,32,32], index: 2, kind: input, shape index: {}]
  %s3 = inlined_call_operand.hbm [shape: f32[2,1,32], index: 3, kind: input, shape index: {}]
  %s4 = inlined_call_operand.vmem [shape: bf16[2,32,32], index: 4, kind: input, shape index: {}]
  %s5 = inlined_call_operand.vmem [shape: f32[2,1,32], index: 5, kind: input, shape index: {}]
  %s6 = inlined_call_operand.vmem [shape: bf16[2,32,32], index: 6, kind: input, shape index: {}]
  %s7 = inlined_call_operand.vmem [shape: f32[2,1,32], index: 7, kind: input, shape index: {}]
  %s8 = inlined_call_operand.hbm [shape: bf16[2,32,32], index: 8, kind: input, shape index: {}]
  %s9 = inlined_call_operand.vmem [shape: f32[2,1,32], index: 9, kind: input, shape index: {}]
  %s10 = inlined_call_operand.hbm [shape: bf16[2,32,64], index: 10, kind: input, shape index: {}]
  %s11 = inlined_call_operand.vmem [shape: f32[2,1,64], index: 11, kind: input, shape index: {}]
  %s12 = inlined_call_operand.vmem [shape: bf16[2,64,32], index: 12, kind: input, shape index: {}]
  %s13 = inlined_call_operand.vmem [shape: f32[2,1,32], index: 13, kind: input, shape index: {}]
  %s14 = inlined_call_operand.vmem [shape: f32[2,1,32], index: 14, kind: input, shape index: {}]
  %s15 = inlined_call_operand.hbm [shape: f32[2,1,32], index: 15, kind: input, shape index: {}]
  %s16 = inlined_call_operand.vmem [shape: f32[2,1,32], index: 16, kind: input, shape index: {}]
  %s17 = inlined_call_operand.hbm [shape: f32[2,1,32], index: 17, kind: input, shape index: {}]
  %s18 = inlined_call_operand.hbm [shape: f32[2,8,32], index: 18, kind: output, shape index: {}]
  %s19 = sld [smem:[#allocation0]]
  $region137: #{tpu_custom_call.1} parent=0
    _
  %s21 = ssub.s32 1, %s19
  %s22 = scalar_select 0, %s21, %s19
  $region1: #{tpu_custom_call.1} parent=0
    #allocation2 [shape = 'u8[8192]{0}', space=vmem, size = 0x2000, scoped, tag = 'input window, operand 0']
    #allocation3 [shape = 's32[2]{0}', space=sflag, size = 0x8, scoped, tag = 'scoped memory for tpu_custom_call.1']
    #allocation4 [shape = 's32[2]{0}', space=sflag, size = 0x8, scoped, tag = 'scoped memory for tpu_custom_call.1']
    #allocation5 [shape = 'u8[1024]{0}', space=vmem, size = 0x400, scoped, tag = 'input window, operand 1']
    #allocation6 [shape = 's32[2]{0}', space=sflag, size = 0x8, scoped, tag = 'scoped memory for tpu_custom_call.1']
    #allocation7 [shape = 'u8[1024]{0}', space=vmem, size = 0x400, scoped, tag = 'input window, operand 3']
    #allocation8 [shape = 'u8[16384]{0}', space=vmem, size = 0x4000, scoped, tag = 'input window, operand 8']
    #allocation9 [shape = 's32[2]{0}', space=sflag, size = 0x8, scoped, tag = 'scoped memory for tpu_custom_call.1']
    #allocation10 [shape = 'u8[16384]{0}', space=vmem, size = 0x4000, scoped, tag = 'input window, operand 10']
    #allocation11 [shape = 'u8[1024]{0}', space=vmem, size = 0x400, scoped, tag = 'input window, operand 15']
    #allocation12 [shape = 's32[2]{0}', space=sflag, size = 0x8, scoped, tag = 'scoped memory for tpu_custom_call.1']
    #allocation13 [shape = 'u8[1024]{0}', space=vmem, size = 0x400, scoped, tag = 'input window, operand 17']
    #allocation14 [shape = 'u8[8192]{0}', space=vmem, size = 0x2000, scoped, tag = 'output window, operand 0']
    %23 = vsyncpa [#allocation3], 0
    %s24 = scalar_lea.sflag [#allocation3], 1
    %25 = vsyncpa %s24, 0
    %26 = vsyncpa [#allocation6], 0
    %s27 = scalar_lea.sflag [#allocation6], 1
    %28 = vsyncpa %s27, 0
    %29 = vsyncpa [#allocation9], 0
    %s30 = scalar_lea.sflag [#allocation9], 1
    %31 = vsyncpa %s30, 0
    %32 = vsyncpa [#allocation12], 0
    %s33 = scalar_lea.sflag [#allocation12], 1
    %34 = vsyncpa %s33, 0
    %35 = vsyncpa [#allocation4], 0
    %s36 = scalar_lea.sflag [#allocation4], 1
    %37 = vsyncpa %s36, 0
    loop: start=0, step=1, limit=6
    $region2: #{tpu_custom_call.1} parent=1 // loop_pre_header
      _
    $region3: #{tpu_custom_call.1} parent=1 // loop_header
      %s39 = sphi 0, %s43
      %p40 = scmp.ge.s32.totalorder %s39, 6
      %s46 = sphi 0, %s58
      %s47 = sphi 0, %s54
      %s48 = sphi 0, %s46
      %s49 = sphi 0, %s47
      %s50 = sphi 0, %s48
      %s51 = sphi 0, %s49
      %s61 = sphi 0, %s63
      %s64 = sphi 0, %s61
      %s65 = sphi 0, %s64
      %s81 = sphi 0, %s65
      %s87 = sphi 0, %s89
      %s90 = sphi 0, %s87
      %s91 = sphi 0, %s90
      %s107 = sphi 0, %s91
      %s113 = sphi 0, %s115
      %s116 = sphi 0, %s113
      %s117 = sphi 0, %s116
      %s133 = sphi 0, %s117
      %s139 = sphi 0, %s141
      %s142 = sphi 0, %s139
      %s143 = sphi 0, %s142
      %s159 = sphi 0, %s143
      %s165 = sphi 0, %s167
      %s168 = sphi 0, %s165
      %s169 = sphi 0, %s168
      %s185 = sphi 0, %s169
      %s191 = sphi 0, %s193
      %s194 = sphi 0, %s191
      %s195 = sphi 0, %s194
      %s211 = sphi 0, %s195
      %s217 = sphi 0, %s219
      %s220 = sphi 0, %s217
      %s221 = sphi 0, %s220
      %s237 = sphi 0, %s221
      %s243 = sphi 0, %s245
      %s246 = sphi 0, %s243
      %s247 = sphi 0, %s246
      %s263 = sphi 0, %s247
      %s269 = sphi 0, %s271
      %s272 = sphi 0, %s269
      %s273 = sphi 0, %s272
      %s289 = sphi 0, %s273
      %s295 = sphi 0, %s297
      %s298 = sphi 0, %s295
      %s299 = sphi 0, %s298
      %s315 = sphi 0, %s299
      %s321 = sphi 0, %s323
      %s324 = sphi 0, %s321
      %s325 = sphi 0, %s324
      %s341 = sphi 0, %s325
      %s347 = sphi 0, %s349
      %s350 = sphi 0, %s347
      %s351 = sphi 0, %s350
      %s367 = sphi 0, %s351
      %s373 = sphi 0, %s375
      %s376 = sphi 0, %s373
      %s377 = sphi 0, %s376
      %s393 = sphi 0, %s377
      %s399 = sphi 0, %s401
      %s402 = sphi 0, %s399
      %s403 = sphi 0, %s402
      %s419 = sphi 0, %s403
      %s425 = sphi 0, %s427
      %s428 = sphi 0, %s425
      %s429 = sphi 0, %s428
      %s445 = sphi 0, %s429
      %s451 = sphi 0, %s453
      %s454 = sphi 0, %s451
      %s455 = sphi 0, %s454
      %s471 = sphi 0, %s455
      %s477 = sphi 0, %s479
      %s480 = sphi 0, %s477
      %s481 = sphi 0, %s480
      %s497 = sphi 0, %s481
      %s503 = sphi 0, %s505
      %s506 = sphi 0, %s503
      %s507 = sphi 0, %s506
      %s523 = sphi 0, %s507
      %s529 = sphi 0, %s531
      %s532 = sphi 0, %s529
      %s533 = sphi 0, %s532
      %s549 = sphi 0, %s533
    $region4: #{tpu_custom_call.1} parent=1 // loop_header_branch
      %42 = sbr.rel (%p40) target = $region8
    $region5: #{tpu_custom_call.1} parent=1 // loop_body
      %s44 = ssub.s32 %s39, 1
      %s45 = ssub.s32 %s39, 2
      %s52 = sadd.s32 1, %s47
      %p53 = scmp.ge.s32.totalorder %s52, 2
      %s54 = scalar_select %p53, 0, %s52
      %s55 = sadd.s32 1, %s46
      %s56 = scalar_select %p53, %s55, %s46
      %p57 = scmp.ge.s32.totalorder %s56, 2
      %s58 = scalar_select %p57, 0, %s56
      %s59 = ssub.s32 %s46, %s58
      %p60 = scmp.eq.s32.totalorder %s59, 0
      %s62 = sadd.s32 %s61, 1
      %s63 = scalar_select %p60, %s61, %s62
      %p66 = pneg %p60
      %p67 = scmp.eq.s32.totalorder %s39, 3
      %p68 = por %p66, %p67
      %p69 = scmp.ne.s32.totalorder %s61, %s64
      %p70 = scmp.eq.s32.totalorder %s39, 0
      %p71 = por %p69, %p70
      %p72 = scmp.ne.s32.totalorder %s61, %s64
      %p73 = scmp.eq.s32.totalorder %s44, 3
      %p74 = por %p72, %p73
      %p75 = scmp.ne.s32.totalorder %s64, %s65
      %p76 = scmp.eq.s32.totalorder %s44, 0
      %p77 = por %p75, %p76
      %p78 = scmp.ne.s32.totalorder %s64, %s65
      %p79 = scmp.eq.s32.totalorder %s45, 3
      %p80 = por %p78, %p79
      %p82 = scmp.ne.s32.totalorder %s65, %s81
      %p83 = scmp.eq.s32.totalorder %s45, 0
      %p84 = por %p82, %p83
      %s85 = ssub.s32 %s46, %s58
      %p86 = scmp.eq.s32.totalorder %s85, 0
      %s88 = sadd.s32 %s87, 1
      %s89 = scalar_select %p86, %s87, %s88
      %p92 = pneg %p86
      %p93 = scmp.eq.s32.totalorder %s39, 3
      %p94 = por %p92, %p93
      %p95 = scmp.ne.s32.totalorder %s87, %s90
      %p96 = scmp.eq.s32.totalorder %s39, 0
      %p97 = por %p95, %p96
      %p98 = scmp.ne.s32.totalorder %s87, %s90
      %p99 = scmp.eq.s32.totalorder %s44, 3
      %p100 = por %p98, %p99
      %p101 = scmp.ne.s32.totalorder %s90, %s91
      %p102 = scmp.eq.s32.totalorder %s44, 0
      %p103 = por %p101, %p102
      %p104 = scmp.ne.s32.totalorder %s90, %s91
      %p105 = scmp.eq.s32.totalorder %s45, 3
      %p106 = por %p104, %p105
      %p108 = scmp.ne.s32.totalorder %s91, %s107
      %p109 = scmp.eq.s32.totalorder %s45, 0
      %p110 = por %p108, %p109
      %s111 = ssub.s32 %s47, %s54
      %p112 = scmp.eq.s32.totalorder %s111, 0
      %s114 = sadd.s32 %s113, 1
      %s115 = scalar_select %p112, %s113, %s114
      %p118 = pneg %p112
      %p119 = scmp.eq.s32.totalorder %s39, 3
      %p120 = por %p118, %p119
      %p121 = scmp.ne.s32.totalorder %s113, %s116
      %p122 = scmp.eq.s32.totalorder %s39, 0
      %p123 = por %p121, %p122
      %p124 = scmp.ne.s32.totalorder %s113, %s116
      %p125 = scmp.eq.s32.totalorder %s44, 3
      %p126 = por %p124, %p125
      %p127 = scmp.ne.s32.totalorder %s116, %s117
      %p128 = scmp.eq.s32.totalorder %s44, 0
      %p129 = por %p127, %p128
      %p130 = scmp.ne.s32.totalorder %s116, %s117
      %p131 = scmp.eq.s32.totalorder %s45, 3
      %p132 = por %p130, %p131
      %p134 = scmp.ne.s32.totalorder %s117, %s133
      %p135 = scmp.eq.s32.totalorder %s45, 0
      %p136 = por %p134, %p135
      %s137 = ssub.s32 %s47, %s54
      %p138 = scmp.eq.s32.totalorder %s137, 0
      %s140 = sadd.s32 %s139, 1
      %s141 = scalar_select %p138, %s139, %s140
      %p144 = pneg %p138
      %p145 = scmp.eq.s32.totalorder %s39, 3
      %p146 = por %p144, %p145
      %p147 = scmp.ne.s32.totalorder %s139, %s142
      %p148 = scmp.eq.s32.totalorder %s39, 0
      %p149 = por %p147, %p148
      %p150 = scmp.ne.s32.totalorder %s139, %s142
      %p151 = scmp.eq.s32.totalorder %s44, 3
      %p152 = por %p150, %p151
      %p153 = scmp.ne.s32.totalorder %s142, %s143
      %p154 = scmp.eq.s32.totalorder %s44, 0
      %p155 = por %p153, %p154
      %p156 = scmp.ne.s32.totalorder %s142, %s143
      %p157 = scmp.eq.s32.totalorder %s45, 3
      %p158 = por %p156, %p157
      %p160 = scmp.ne.s32.totalorder %s143, %s159
      %p161 = scmp.eq.s32.totalorder %s45, 0
      %p162 = por %p160, %p161
      %s163 = ssub.s32 %s47, %s54
      %p164 = scmp.eq.s32.totalorder %s163, 0
      %s166 = sadd.s32 %s165, 1
      %s167 = scalar_select %p164, %s165, %s166
      %p170 = pneg %p164
      %p171 = scmp.eq.s32.totalorder %s39, 3
      %p172 = por %p170, %p171
      %p173 = scmp.ne.s32.totalorder %s165, %s168
      %p174 = scmp.eq.s32.totalorder %s39, 0
      %p175 = por %p173, %p174
      %p176 = scmp.ne.s32.totalorder %s165, %s168
      %p177 = scmp.eq.s32.totalorder %s44, 3
      %p178 = por %p176, %p177
      %p179 = scmp.ne.s32.totalorder %s168, %s169
      %p180 = scmp.eq.s32.totalorder %s44, 0
      %p181 = por %p179, %p180
      %p182 = scmp.ne.s32.totalorder %s168, %s169
      %p183 = scmp.eq.s32.totalorder %s45, 3
      %p184 = por %p182, %p183
      %p186 = scmp.ne.s32.totalorder %s169, %s185
      %p187 = scmp.eq.s32.totalorder %s45, 0
      %p188 = por %p186, %p187
      %s189 = ssub.s32 %s47, %s54
      %p190 = scmp.eq.s32.totalorder %s189, 0
      %s192 = sadd.s32 %s191, 1
      %s193 = scalar_select %p190, %s191, %s192
      %p196 = pneg %p190
      %p197 = scmp.eq.s32.totalorder %s39, 3
      %p198 = por %p196, %p197
      %p199 = scmp.ne.s32.totalorder %s191, %s194
      %p200 = scmp.eq.s32.totalorder %s39, 0
      %p201 = por %p199, %p200
      %p202 = scmp.ne.s32.totalorder %s191, %s194
      %p203 = scmp.eq.s32.totalorder %s44, 3
      %p204 = por %p202, %p203
      %p205 = scmp.ne.s32.totalorder %s194, %s195
      %p206 = scmp.eq.s32.totalorder %s44, 0
      %p207 = por %p205, %p206
      %p208 = scmp.ne.s32.totalorder %s194, %s195
      %p209 = scmp.eq.s32.totalorder %s45, 3
      %p210 = por %p208, %p209
      %p212 = scmp.ne.s32.totalorder %s195, %s211
      %p213 = scmp.eq.s32.totalorder %s45, 0
      %p214 = por %p212, %p213
      %s215 = ssub.s32 %s47, %s54
      %p216 = scmp.eq.s32.totalorder %s215, 0
      %s218 = sadd.s32 %s217, 1
      %s219 = scalar_select %p216, %s217, %s218
      %p222 = pneg %p216
      %p223 = scmp.eq.s32.totalorder %s39, 3
      %p224 = por %p222, %p223
      %p225 = scmp.ne.s32.totalorder %s217, %s220
      %p226 = scmp.eq.s32.totalorder %s39, 0
      %p227 = por %p225, %p226
      %p228 = scmp.ne.s32.totalorder %s217, %s220
      %p229 = scmp.eq.s32.totalorder %s44, 3
      %p230 = por %p228, %p229
      %p231 = scmp.ne.s32.totalorder %s220, %s221
      %p232 = scmp.eq.s32.totalorder %s44, 0
      %p233 = por %p231, %p232
      %p234 = scmp.ne.s32.totalorder %s220, %s221
      %p235 = scmp.eq.s32.totalorder %s45, 3
      %p236 = por %p234, %p235
      %p238 = scmp.ne.s32.totalorder %s221, %s237
      %p239 = scmp.eq.s32.totalorder %s45, 0
      %p240 = por %p238, %p239
      %s241 = ssub.s32 %s47, %s54
      %p242 = scmp.eq.s32.totalorder %s241, 0
      %s244 = sadd.s32 %s243, 1
      %s245 = scalar_select %p242, %s243, %s244
      %p248 = pneg %p242
      %p249 = scmp.eq.s32.totalorder %s39, 3
      %p250 = por %p248, %p249
      %p251 = scmp.ne.s32.totalorder %s243, %s246
      %p252 = scmp.eq.s32.totalorder %s39, 0
      %p253 = por %p251, %p252
      %p254 = scmp.ne.s32.totalorder %s243, %s246
      %p255 = scmp.eq.s32.totalorder %s44, 3
      %p256 = por %p254, %p255
      %p257 = scmp.ne.s32.totalorder %s246, %s247
      %p258 = scmp.eq.s32.totalorder %s44, 0
      %p259 = por %p257, %p258
      %p260 = scmp.ne.s32.totalorder %s246, %s247
      %p261 = scmp.eq.s32.totalorder %s45, 3
      %p262 = por %p260, %p261
      %p264 = scmp.ne.s32.totalorder %s247, %s263
      %p265 = scmp.eq.s32.totalorder %s45, 0
      %p266 = por %p264, %p265
      %s267 = ssub.s32 %s47, %s54
      %p268 = scmp.eq.s32.totalorder %s267, 0
      %s270 = sadd.s32 %s269, 1
      %s271 = scalar_select %p268, %s269, %s270
      %p274 = pneg %p268
      %p275 = scmp.eq.s32.totalorder %s39, 3
      %p276 = por %p274, %p275
      %p277 = scmp.ne.s32.totalorder %s269, %s272
      %p278 = scmp.eq.s32.totalorder %s39, 0
      %p279 = por %p277, %p278
      %p280 = scmp.ne.s32.totalorder %s269, %s272
      %p281 = scmp.eq.s32.totalorder %s44, 3
      %p282 = por %p280, %p281
      %p283 = scmp.ne.s32.totalorder %s272, %s273
      %p284 = scmp.eq.s32.totalorder %s44, 0
      %p285 = por %p283, %p284
      %p286 = scmp.ne.s32.totalorder %s272, %s273
      %p287 = scmp.eq.s32.totalorder %s45, 3
      %p288 = por %p286, %p287
      %p290 = scmp.ne.s32.totalorder %s273, %s289
      %p291 = scmp.eq.s32.totalorder %s45, 0
      %p292 = por %p290, %p291
      %s293 = ssub.s32 %s47, %s54
      %p294 = scmp.eq.s32.totalorder %s293, 0
      %s296 = sadd.s32 %s295, 1
      %s297 = scalar_select %p294, %s295, %s296
      %p300 = pneg %p294
      %p301 = scmp.eq.s32.totalorder %s39, 3
      %p302 = por %p300, %p301
      %p303 = scmp.ne.s32.totalorder %s295, %s298
      %p304 = scmp.eq.s32.totalorder %s39, 0
      %p305 = por %p303, %p304
      %p306 = scmp.ne.s32.totalorder %s295, %s298
      %p307 = scmp.eq.s32.totalorder %s44, 3
      %p308 = por %p306, %p307
      %p309 = scmp.ne.s32.totalorder %s298, %s299
      %p310 = scmp.eq.s32.totalorder %s44, 0
      %p311 = por %p309, %p310
      %p312 = scmp.ne.s32.totalorder %s298, %s299
      %p313 = scmp.eq.s32.totalorder %s45, 3
      %p314 = por %p312, %p313
      %p316 = scmp.ne.s32.totalorder %s299, %s315
      %p317 = scmp.eq.s32.totalorder %s45, 0
      %p318 = por %p316, %p317
      %s319 = ssub.s32 %s47, %s54
      %p320 = scmp.eq.s32.totalorder %s319, 0
      %s322 = sadd.s32 %s321, 1
      %s323 = scalar_select %p320, %s321, %s322
      %p326 = pneg %p320
      %p327 = scmp.eq.s32.totalorder %s39, 3
      %p328 = por %p326, %p327
      %p329 = scmp.ne.s32.totalorder %s321, %s324
      %p330 = scmp.eq.s32.totalorder %s39, 0
      %p331 = por %p329, %p330
      %p332 = scmp.ne.s32.totalorder %s321, %s324
      %p333 = scmp.eq.s32.totalorder %s44, 3
      %p334 = por %p332, %p333
      %p335 = scmp.ne.s32.totalorder %s324, %s325
      %p336 = scmp.eq.s32.totalorder %s44, 0
      %p337 = por %p335, %p336
      %p338 = scmp.ne.s32.totalorder %s324, %s325
      %p339 = scmp.eq.s32.totalorder %s45, 3
      %p340 = por %p338, %p339
      %p342 = scmp.ne.s32.totalorder %s325, %s341
      %p343 = scmp.eq.s32.totalorder %s45, 0
      %p344 = por %p342, %p343
      %s345 = ssub.s32 %s47, %s54
      %p346 = scmp.eq.s32.totalorder %s345, 0
      %s348 = sadd.s32 %s347, 1
      %s349 = scalar_select %p346, %s347, %s348
      %p352 = pneg %p346
      %p353 = scmp.eq.s32.totalorder %s39, 3
      %p354 = por %p352, %p353
      %p355 = scmp.ne.s32.totalorder %s347, %s350
      %p356 = scmp.eq.s32.totalorder %s39, 0
      %p357 = por %p355, %p356
      %p358 = scmp.ne.s32.totalorder %s347, %s350
      %p359 = scmp.eq.s32.totalorder %s44, 3
      %p360 = por %p358, %p359
      %p361 = scmp.ne.s32.totalorder %s350, %s351
      %p362 = scmp.eq.s32.totalorder %s44, 0
      %p363 = por %p361, %p362
      %p364 = scmp.ne.s32.totalorder %s350, %s351
      %p365 = scmp.eq.s32.totalorder %s45, 3
      %p366 = por %p364, %p365
      %p368 = scmp.ne.s32.totalorder %s351, %s367
      %p369 = scmp.eq.s32.totalorder %s45, 0
      %p370 = por %p368, %p369
      %s371 = ssub.s32 %s47, %s54
      %p372 = scmp.eq.s32.totalorder %s371, 0
      %s374 = sadd.s32 %s373, 1
      %s375 = scalar_select %p372, %s373, %s374
      %p378 = pneg %p372
      %p379 = scmp.eq.s32.totalorder %s39, 3
      %p380 = por %p378, %p379
      %p381 = scmp.ne.s32.totalorder %s373, %s376
      %p382 = scmp.eq.s32.totalorder %s39, 0
      %p383 = por %p381, %p382
      %p384 = scmp.ne.s32.totalorder %s373, %s376
      %p385 = scmp.eq.s32.totalorder %s44, 3
      %p386 = por %p384, %p385
      %p387 = scmp.ne.s32.totalorder %s376, %s377
      %p388 = scmp.eq.s32.totalorder %s44, 0
      %p389 = por %p387, %p388
      %p390 = scmp.ne.s32.totalorder %s376, %s377
      %p391 = scmp.eq.s32.totalorder %s45, 3
      %p392 = por %p390, %p391
      %p394 = scmp.ne.s32.totalorder %s377, %s393
      %p395 = scmp.eq.s32.totalorder %s45, 0
      %p396 = por %p394, %p395
      %s397 = ssub.s32 %s47, %s54
      %p398 = scmp.eq.s32.totalorder %s397, 0
      %s400 = sadd.s32 %s399, 1
      %s401 = scalar_select %p398, %s399, %s400
      %p404 = pneg %p398
      %p405 = scmp.eq.s32.totalorder %s39, 3
      %p406 = por %p404, %p405
      %p407 = scmp.ne.s32.totalorder %s399, %s402
      %p408 = scmp.eq.s32.totalorder %s39, 0
      %p409 = por %p407, %p408
      %p410 = scmp.ne.s32.totalorder %s399, %s402
      %p411 = scmp.eq.s32.totalorder %s44, 3
      %p412 = por %p410, %p411
      %p413 = scmp.ne.s32.totalorder %s402, %s403
      %p414 = scmp.eq.s32.totalorder %s44, 0
      %p415 = por %p413, %p414
      %p416 = scmp.ne.s32.totalorder %s402, %s403
      %p417 = scmp.eq.s32.totalorder %s45, 3
      %p418 = por %p416, %p417
      %p420 = scmp.ne.s32.totalorder %s403, %s419
      %p421 = scmp.eq.s32.totalorder %s45, 0
      %p422 = por %p420, %p421
      %s423 = ssub.s32 %s47, %s54
      %p424 = scmp.eq.s32.totalorder %s423, 0
      %s426 = sadd.s32 %s425, 1
      %s427 = scalar_select %p424, %s425, %s426
      %p430 = pneg %p424
      %p431 = scmp.eq.s32.totalorder %s39, 3
      %p432 = por %p430, %p431
      %p433 = scmp.ne.s32.totalorder %s425, %s428
      %p434 = scmp.eq.s32.totalorder %s39, 0
      %p435 = por %p433, %p434
      %p436 = scmp.ne.s32.totalorder %s425, %s428
      %p437 = scmp.eq.s32.totalorder %s44, 3
      %p438 = por %p436, %p437
      %p439 = scmp.ne.s32.totalorder %s428, %s429
      %p440 = scmp.eq.s32.totalorder %s44, 0
      %p441 = por %p439, %p440
      %p442 = scmp.ne.s32.totalorder %s428, %s429
      %p443 = scmp.eq.s32.totalorder %s45, 3
      %p444 = por %p442, %p443
      %p446 = scmp.ne.s32.totalorder %s429, %s445
      %p447 = scmp.eq.s32.totalorder %s45, 0
      %p448 = por %p446, %p447
      %s449 = ssub.s32 %s47, %s54
      %p450 = scmp.eq.s32.totalorder %s449, 0
      %s452 = sadd.s32 %s451, 1
      %s453 = scalar_select %p450, %s451, %s452
      %p456 = pneg %p450
      %p457 = scmp.eq.s32.totalorder %s39, 3
      %p458 = por %p456, %p457
      %p459 = scmp.ne.s32.totalorder %s451, %s454
      %p460 = scmp.eq.s32.totalorder %s39, 0
      %p461 = por %p459, %p460
      %p462 = scmp.ne.s32.totalorder %s451, %s454
      %p463 = scmp.eq.s32.totalorder %s44, 3
      %p464 = por %p462, %p463
      %p465 = scmp.ne.s32.totalorder %s454, %s455
      %p466 = scmp.eq.s32.totalorder %s44, 0
      %p467 = por %p465, %p466
      %p468 = scmp.ne.s32.totalorder %s454, %s455
      %p469 = scmp.eq.s32.totalorder %s45, 3
      %p470 = por %p468, %p469
      %p472 = scmp.ne.s32.totalorder %s455, %s471
      %p473 = scmp.eq.s32.totalorder %s45, 0
      %p474 = por %p472, %p473
      %s475 = ssub.s32 %s47, %s54
      %p476 = scmp.eq.s32.totalorder %s475, 0
      %s478 = sadd.s32 %s477, 1
      %s479 = scalar_select %p476, %s477, %s478
      %p482 = pneg %p476
      %p483 = scmp.eq.s32.totalorder %s39, 3
      %p484 = por %p482, %p483
      %p485 = scmp.ne.s32.totalorder %s477, %s480
      %p486 = scmp.eq.s32.totalorder %s39, 0
      %p487 = por %p485, %p486
      %p488 = scmp.ne.s32.totalorder %s477, %s480
      %p489 = scmp.eq.s32.totalorder %s44, 3
      %p490 = por %p488, %p489
      %p491 = scmp.ne.s32.totalorder %s480, %s481
      %p492 = scmp.eq.s32.totalorder %s44, 0
      %p493 = por %p491, %p492
      %p494 = scmp.ne.s32.totalorder %s480, %s481
      %p495 = scmp.eq.s32.totalorder %s45, 3
      %p496 = por %p494, %p495
      %p498 = scmp.ne.s32.totalorder %s481, %s497
      %p499 = scmp.eq.s32.totalorder %s45, 0
      %p500 = por %p498, %p499
      %s501 = ssub.s32 %s47, %s54
      %p502 = scmp.eq.s32.totalorder %s501, 0
      %s504 = sadd.s32 %s503, 1
      %s505 = scalar_select %p502, %s503, %s504
      %p508 = pneg %p502
      %p509 = scmp.eq.s32.totalorder %s39, 3
      %p510 = por %p508, %p509
      %p511 = scmp.ne.s32.totalorder %s503, %s506
      %p512 = scmp.eq.s32.totalorder %s39, 0
      %p513 = por %p511, %p512
      %p514 = scmp.ne.s32.totalorder %s503, %s506
      %p515 = scmp.eq.s32.totalorder %s44, 3
      %p516 = por %p514, %p515
      %p517 = scmp.ne.s32.totalorder %s506, %s507
      %p518 = scmp.eq.s32.totalorder %s44, 0
      %p519 = por %p517, %p518
      %p520 = scmp.ne.s32.totalorder %s506, %s507
      %p521 = scmp.eq.s32.totalorder %s45, 3
      %p522 = por %p520, %p521
      %p524 = scmp.ne.s32.totalorder %s507, %s523
      %p525 = scmp.eq.s32.totalorder %s45, 0
      %p526 = por %p524, %p525
      %s527 = ssub.s32 %s46, %s58
      %p528 = scmp.eq.s32.totalorder %s527, 0
      %s530 = sadd.s32 %s529, 1
      %s531 = scalar_select %p528, %s529, %s530
      %p534 = pneg %p528
      %p535 = scmp.eq.s32.totalorder %s39, 3
      %p536 = por %p534, %p535
      %p537 = scmp.ne.s32.totalorder %s529, %s532
      %p538 = scmp.eq.s32.totalorder %s39, 0
      %p539 = por %p537, %p538
      %p540 = scmp.ne.s32.totalorder %s529, %s532
      %p541 = scmp.eq.s32.totalorder %s44, 3
      %p542 = por %p540, %p541
      %p543 = scmp.ne.s32.totalorder %s532, %s533
      %p544 = scmp.eq.s32.totalorder %s44, 0
      %p545 = por %p543, %p544
      %p546 = scmp.ne.s32.totalorder %s532, %s533
      %p547 = scmp.eq.s32.totalorder %s45, 3
      %p548 = por %p546, %p547
      %p550 = scmp.ne.s32.totalorder %s533, %s549
      %p551 = scmp.eq.s32.totalorder %s45, 0
      %p552 = por %p550, %p551
      %p553 = scmp.le.s32.totalorder 1, %s39
      %p554 = scmp.lt.s32.totalorder %s39, 5
      %p555 = pnand %p553, %p554
      %p556 = pneg %p555
      // Predicated region
      $region9: #{tpu_custom_call.1} parent=5 // pred_check
        _
      $region10: #{tpu_custom_call.1} parent=5 // pred_check_branch
        %558 = sbr.rel (%p555) target = $region12
      $region11: #{tpu_custom_call.1} parent=5 // pred_region
        %s559 = ssub.s32 %s39, 1
      $region12: #{tpu_custom_call.1} parent=5 // pred_fallthru
        _
      %p560 = scmp.lt.s32.totalorder %s39, 4
      // Predicated region
      $region13: #{tpu_custom_call.1} parent=5 // pred_check
        %p561 = pneg %p560
      $region14: #{tpu_custom_call.1} parent=5 // pred_check_branch
        %563 = sbr.rel (%p561) target = $region16
      $region15: #{tpu_custom_call.1} parent=5 // pred_region
        // Predicated region
        $region17: #{tpu_custom_call.1} parent=15 // pred_check
          %p564 = pneg %p71
        $region18: #{tpu_custom_call.1} parent=15 // pred_check_branch
          %566 = sbr.rel (%p564) target = $region20
        $region19: #{tpu_custom_call.1} parent=15 // pred_region
          %s567 = sand.u32 %s61, 1
          %s568 = scalar_lea.sflag [#allocation3], %s567
          %s569 = sand.u32 %s61, 1
          %s570 = smul.addr %s569, 8
          %s571 = scalar_lea.vmem [#allocation2], %s570
          %573 = vsyncadd %s568, 0
          %s574 = smul.addr %s46, 8
          %s575 = scalar_lea.hbm %s0, %s574
          %s577 = sshll.u32 %s575, 4
          %s578 = int_to_ptr.hbm [resolvable:$true] %s577
          %s579 = sshll.u32 %s571, 4
          %s580 = int_to_ptr.vmem [resolvable:$true] %s579
          %582 = dma.hbm_to_vmem [thread:$0]  %s578, 128, %s580, %s568
        $region20: #{tpu_custom_call.1} parent=15 // pred_fallthru
          _
        // Predicated region
        $region21: #{tpu_custom_call.1} parent=15 // pred_check
          %p583 = pneg %p97
        $region22: #{tpu_custom_call.1} parent=15 // pred_check_branch
          %585 = sbr.rel (%p583) target = $region24
        $region23: #{tpu_custom_call.1} parent=15 // pred_region
          %s586 = sand.u32 %s39, 1
          %s587 = scalar_lea.sflag [#allocation6], %s586
          %s588 = sand.u32 %s87, 1
          %s589 = scalar_lea.vmem [#allocation5], %s588
          %591 = vsyncadd %s587, 0
          %s592 = scalar_lea.hbm %s1, %s46
          %s594 = sshll.u32 %s592, 4
          %s595 = int_to_ptr.hbm [resolvable:$true] %s594
          %s596 = sshll.u32 %s589, 4
          %s597 = int_to_ptr.vmem [resolvable:$true] %s596
          %599 = dma.hbm_to_vmem [thread:$0]  %s595, 16, %s597, %s587
        $region24: #{tpu_custom_call.1} parent=15 // pred_fallthru
          _
        // Predicated region
        $region25: #{tpu_custom_call.1} parent=15 // pred_check
          %p600 = pneg %p123
        $region26: #{tpu_custom_call.1} parent=15 // pred_check_branch
          %602 = sbr.rel (%p600) target = $region28
        $region27: #{tpu_custom_call.1} parent=15 // pred_region
          %p603 = scmp.lt.s32.totalorder %s47, 1
          %s604 = scalar_select %p603, %s47, 1
          %s605 = smul.addr %s604, 4
          %s606 = smul.addr %s605, 4
          %s607 = scalar_lea.vmem %s2, %s606
        $region28: #{tpu_custom_call.1} parent=15 // pred_fallthru
          _
        // Predicated region
        $region29: #{tpu_custom_call.1} parent=15 // pred_check
          %p608 = pneg %p149
        $region30: #{tpu_custom_call.1} parent=15 // pred_check_branch
          %610 = sbr.rel (%p608) target = $region32
        $region31: #{tpu_custom_call.1} parent=15 // pred_region
          %s611 = sand.u32 %s39, 1
          %s612 = scalar_lea.sflag [#allocation6], %s611
          %s613 = sand.u32 %s139, 1
          %s614 = scalar_lea.vmem [#allocation7], %s613
          %616 = vsyncadd %s612, 0
          %s617 = scalar_lea.hbm %s3, %s47
          %s619 = sshll.u32 %s617, 4
          %s620 = int_to_ptr.hbm [resolvable:$true] %s619
          %s621 = sshll.u32 %s614, 4
          %s622 = int_to_ptr.vmem [resolvable:$true] %s621
          %624 = dma.hbm_to_vmem [thread:$0]  %s620, 16, %s622, %s612
        $region32: #{tpu_custom_call.1} parent=15 // pred_fallthru
          _
        // Predicated region
        $region33: #{tpu_custom_call.1} parent=15 // pred_check
          %p625 = pneg %p175
        $region34: #{tpu_custom_call.1} parent=15 // pred_check_branch
          %627 = sbr.rel (%p625) target = $region36
        $region35: #{tpu_custom_call.1} parent=15 // pred_region
          %p628 = scmp.lt.s32.totalorder %s47, 1
          %s629 = scalar_select %p628, %s47, 1
          %s630 = smul.addr %s629, 4
          %s631 = smul.addr %s630, 4
          %s632 = scalar_lea.vmem %s4, %s631
        $region36: #{tpu_custom_call.1} parent=15 // pred_fallthru
          _
        // Predicated region
        $region37: #{tpu_custom_call.1} parent=15 // pred_check
          %p633 = pneg %p201
        $region38: #{tpu_custom_call.1} parent=15 // pred_check_branch
          %635 = sbr.rel (%p633) target = $region40
        $region39: #{tpu_custom_call.1} parent=15 // pred_region
          %p636 = scmp.lt.s32.totalorder %s47, 1
          %s637 = scalar_select %p636, %s47, 1
          %s638 = scalar_lea.vmem %s5, %s637
        $region40: #{tpu_custom_call.1} parent=15 // pred_fallthru
          _
        // Predicated region
        $region41: #{tpu_custom_call.1} parent=15 // pred_check
          %p639 = pneg %p227
        $region42: #{tpu_custom_call.1} parent=15 // pred_check_branch
          %641 = sbr.rel (%p639) target = $region44
        $region43: #{tpu_custom_call.1} parent=15 // pred_region
          %p642 = scmp.lt.s32.totalorder %s47, 1
          %s643 = scalar_select %p642, %s47, 1
          %s644 = smul.addr %s643, 4
          %s645 = smul.addr %s644, 4
          %s646 = scalar_lea.vmem %s6, %s645
        $region44: #{tpu_custom_call.1} parent=15 // pred_fallthru
          _
        // Predicated region
        $region45: #{tpu_custom_call.1} parent=15 // pred_check
          %p647 = pneg %p253
        $region46: #{tpu_custom_call.1} parent=15 // pred_check_branch
          %649 = sbr.rel (%p647) target = $region48
        $region47: #{tpu_custom_call.1} parent=15 // pred_region
          %p650 = scmp.lt.s32.totalorder %s47, 1
          %s651 = scalar_select %p650, %s47, 1
          %s652 = scalar_lea.vmem %s7, %s651
        $region48: #{tpu_custom_call.1} parent=15 // pred_fallthru
          _
        // Predicated region
        $region49: #{tpu_custom_call.1} parent=15 // pred_check
          %p653 = pneg %p279
        $region50: #{tpu_custom_call.1} parent=15 // pred_check_branch
          %655 = sbr.rel (%p653) target = $region52
        $region51: #{tpu_custom_call.1} parent=15 // pred_region
          %s656 = sand.u32 %s39, 1
          %s657 = scalar_lea.sflag [#allocation9], %s656
          %s658 = sand.u32 %s269, 1
          %s659 = smul.addr %s658, 16
          %s660 = scalar_lea.vmem [#allocation8], %s659
          %662 = vsyncadd %s657, 0
          %s663 = smul.addr %s47, 4
          %s664 = smul.addr %s663, 4
          %s665 = scalar_lea.hbm %s8, %s664
          %s666 = sshll.u32 %s665, 4
          %s667 = int_to_ptr.hbm [resolvable:$true] %s666
          %s668 = sshll.u32 %s660, 4
          %s669 = int_to_ptr.vmem [resolvable:$true] %s668
          %674 = dma.hbm_to_vmem [thread:$0]  %s667, 256, %s669, %s657, 64, 64, 4
        $region52: #{tpu_custom_call.1} parent=15 // pred_fallthru
          _
        // Predicated region
        $region53: #{tpu_custom_call.1} parent=15 // pred_check
          %p675 = pneg %p305
        $region54: #{tpu_custom_call.1} parent=15 // pred_check_branch
          %677 = sbr.rel (%p675) target = $region56
        $region55: #{tpu_custom_call.1} parent=15 // pred_region
          %p678 = scmp.lt.s32.totalorder %s47, 1
          %s679 = scalar_select %p678, %s47, 1
          %s680 = scalar_lea.vmem %s9, %s679
        $region56: #{tpu_custom_call.1} parent=15 // pred_fallthru
          _
        // Predicated region
        $region57: #{tpu_custom_call.1} parent=15 // pred_check
          %p681 = pneg %p331
        $region58: #{tpu_custom_call.1} parent=15 // pred_check_branch
          %683 = sbr.rel (%p681) target = $region60
        $region59: #{tpu_custom_call.1} parent=15 // pred_region
          %s684 = sand.u32 %s39, 1
          %s685 = scalar_lea.sflag [#allocation9], %s684
          %s686 = sand.u32 %s321, 1
          %s687 = smul.addr %s686, 16
          %s688 = scalar_lea.vmem [#allocation10], %s687
          %690 = vsyncadd %s685, 0
          %s691 = smul.addr %s47, 4
          %s692 = smul.addr %s691, 4
          %s693 = scalar_lea.hbm %s10, %s692
          %s694 = sshll.u32 %s693, 4
          %s695 = int_to_ptr.hbm [resolvable:$true] %s694
          %s696 = sshll.u32 %s688, 4
          %s697 = int_to_ptr.vmem [resolvable:$true] %s696
          %702 = dma.hbm_to_vmem [thread:$0]  %s695, 256, %s697, %s685, 64, 64, 4
        $region60: #{tpu_custom_call.1} parent=15 // pred_fallthru
          _
        // Predicated region
        $region61: #{tpu_custom_call.1} parent=15 // pred_check
          %p703 = pneg %p357
        $region62: #{tpu_custom_call.1} parent=15 // pred_check_branch
          %705 = sbr.rel (%p703) target = $region64
        $region63: #{tpu_custom_call.1} parent=15 // pred_region
          %p706 = scmp.lt.s32.totalorder %s47, 1
          %s707 = scalar_select %p706, %s47, 1
          %s708 = scalar_lea.vmem %s11, %s707
        $region64: #{tpu_custom_call.1} parent=15 // pred_fallthru
          _
        // Predicated region
        $region65: #{tpu_custom_call.1} parent=15 // pred_check
          %p709 = pneg %p383
        $region66: #{tpu_custom_call.1} parent=15 // pred_check_branch
          %711 = sbr.rel (%p709) target = $region68
        $region67: #{tpu_custom_call.1} parent=15 // pred_region
          %p712 = scmp.lt.s32.totalorder %s47, 1
          %s713 = scalar_select %p712, %s47, 1
          %s714 = smul.addr %s713, 8
          %s715 = smul.addr %s714, 4
          %s716 = scalar_lea.vmem %s12, %s715
        $region68: #{tpu_custom_call.1} parent=15 // pred_fallthru
          _
        // Predicated region
        $region69: #{tpu_custom_call.1} parent=15 // pred_check
          %p717 = pneg %p409
        $region70: #{tpu_custom_call.1} parent=15 // pred_check_branch
          %719 = sbr.rel (%p717) target = $region72
        $region71: #{tpu_custom_call.1} parent=15 // pred_region
          %p720 = scmp.lt.s32.totalorder %s47, 1
          %s721 = scalar_select %p720, %s47, 1
          %s722 = scalar_lea.vmem %s13, %s721
        $region72: #{tpu_custom_call.1} parent=15 // pred_fallthru
          _
        // Predicated region
        $region73: #{tpu_custom_call.1} parent=15 // pred_check
          %p723 = pneg %p435
        $region74: #{tpu_custom_call.1} parent=15 // pred_check_branch
          %725 = sbr.rel (%p723) target = $region76
        $region75: #{tpu_custom_call.1} parent=15 // pred_region
          %p726 = scmp.lt.s32.totalorder %s47, 1
          %s727 = scalar_select %p726, %s47, 1
          %s728 = scalar_lea.vmem %s14, %s727
        $region76: #{tpu_custom_call.1} parent=15 // pred_fallthru
          _
        // Predicated region
        $region77: #{tpu_custom_call.1} parent=15 // pred_check
          %p729 = pneg %p461
        $region78: #{tpu_custom_call.1} parent=15 // pred_check_branch
          %731 = sbr.rel (%p729) target = $region80
        $region79: #{tpu_custom_call.1} parent=15 // pred_region
          %s732 = sand.u32 %s39, 1
          %s733 = scalar_lea.sflag [#allocation12], %s732
          %s734 = sand.u32 %s451, 1
          %s735 = scalar_lea.vmem [#allocation11], %s734
          %737 = vsyncadd %s733, 0
          %s738 = scalar_lea.hbm %s15, %s47
          %s740 = sshll.u32 %s738, 4
          %s741 = int_to_ptr.hbm [resolvable:$true] %s740
          %s742 = sshll.u32 %s735, 4
          %s743 = int_to_ptr.vmem [resolvable:$true] %s742
          %745 = dma.hbm_to_vmem [thread:$0]  %s741, 16, %s743, %s733
        $region80: #{tpu_custom_call.1} parent=15 // pred_fallthru
          _
        // Predicated region
        $region81: #{tpu_custom_call.1} parent=15 // pred_check
          %p746 = pneg %p487
        $region82: #{tpu_custom_call.1} parent=15 // pred_check_branch
          %748 = sbr.rel (%p746) target = $region84
        $region83: #{tpu_custom_call.1} parent=15 // pred_region
          %p749 = scmp.lt.s32.totalorder %s47, 1
          %s750 = scalar_select %p749, %s47, 1
          %s751 = scalar_lea.vmem %s16, %s750
        $region84: #{tpu_custom_call.1} parent=15 // pred_fallthru
          _
        // Predicated region
        $region85: #{tpu_custom_call.1} parent=15 // pred_check
          %p752 = pneg %p513
        $region86: #{tpu_custom_call.1} parent=15 // pred_check_branch
          %754 = sbr.rel (%p752) target = $region88
        $region87: #{tpu_custom_call.1} parent=15 // pred_region
          %s755 = sand.u32 %s39, 1
          %s756 = scalar_lea.sflag [#allocation12], %s755
          %s757 = sand.u32 %s503, 1
          %s758 = scalar_lea.vmem [#allocation13], %s757
          %760 = vsyncadd %s756, 0
          %s761 = scalar_lea.hbm %s17, %s47
          %s763 = sshll.u32 %s761, 4
          %s764 = int_to_ptr.hbm [resolvable:$true] %s763
          %s765 = sshll.u32 %s758, 4
          %s766 = int_to_ptr.vmem [resolvable:$true] %s765
          %768 = dma.hbm_to_vmem [thread:$0]  %s764, 16, %s766, %s756
        $region88: #{tpu_custom_call.1} parent=15 // pred_fallthru
          _
      $region16: #{tpu_custom_call.1} parent=5 // pred_fallthru
        _
      %p769 = scmp.le.s32.totalorder 1, %s39
      %p770 = scmp.lt.s32.totalorder %s39, 5
      %p771 = pnand %p769, %p770
      %p772 = pneg %p771
      // Predicated region
      $region89: #{tpu_custom_call.1} parent=5 // pred_check
        _
      $region90: #{tpu_custom_call.1} parent=5 // pred_check_branch
        %774 = sbr.rel (%p771) target = $region92
      $region91: #{tpu_custom_call.1} parent=5 // pred_region
        %s775 = ssub.s32 %s39, 1
        %s776 = sand.u32 %s64, 1
        %s777 = scalar_lea.sflag [#allocation3], %s776
        %s778 = sand.u32 %s64, 1
        %s779 = smul.addr %s778, 8
        %s780 = scalar_lea.vmem [#allocation2], %s779
        // Predicated region
        $region93: #{tpu_custom_call.1} parent=91 // pred_check
          %p781 = pneg %p77
        $region94: #{tpu_custom_call.1} parent=91 // pred_check_branch
          %783 = sbr.rel (%p781) target = $region96
        $region95: #{tpu_custom_call.1} parent=91 // pred_region
          %785 = dma.done %s777, 128
        $region96: #{tpu_custom_call.1} parent=91 // pred_fallthru
          _
        %s786 = sand.u32 %s44, 1
        %s787 = scalar_lea.sflag [#allocation6], %s786
        %s788 = sand.u32 %s90, 1
        %s789 = scalar_lea.vmem [#allocation5], %s788
        // Predicated region
        $region97: #{tpu_custom_call.1} parent=91 // pred_check
          %p790 = pneg %p103
        $region98: #{tpu_custom_call.1} parent=91 // pred_check_branch
          %792 = sbr.rel (%p790) target = $region100
        $region99: #{tpu_custom_call.1} parent=91 // pred_region
          %794 = dma.done %s787, 16
        $region100: #{tpu_custom_call.1} parent=91 // pred_fallthru
          _
        %s795 = sand.u32 %s44, 1
        %s796 = scalar_lea.sflag [#allocation6], %s795
        %s797 = sand.u32 %s142, 1
        %s798 = scalar_lea.vmem [#allocation7], %s797
        // Predicated region
        $region101: #{tpu_custom_call.1} parent=91 // pred_check
          %p799 = pneg %p155
        $region102: #{tpu_custom_call.1} parent=91 // pred_check_branch
          %801 = sbr.rel (%p799) target = $region104
        $region103: #{tpu_custom_call.1} parent=91 // pred_region
          %803 = dma.done %s796, 16
        $region104: #{tpu_custom_call.1} parent=91 // pred_fallthru
          _
        %s804 = sand.u32 %s44, 1
        %s805 = scalar_lea.sflag [#allocation9], %s804
        %s806 = sand.u32 %s272, 1
        %s807 = smul.addr %s806, 16
        %s808 = scalar_lea.vmem [#allocation8], %s807
        // Predicated region
        $region105: #{tpu_custom_call.1} parent=91 // pred_check
          %p809 = pneg %p285
        $region106: #{tpu_custom_call.1} parent=91 // pred_check_branch
          %811 = sbr.rel (%p809) target = $region108
        $region107: #{tpu_custom_call.1} parent=91 // pred_region
          %813 = dma.done %s805, 256
        $region108: #{tpu_custom_call.1} parent=91 // pred_fallthru
          _
        %s814 = sand.u32 %s44, 1
        %s815 = scalar_lea.sflag [#allocation9], %s814
        %s816 = sand.u32 %s324, 1
        %s817 = smul.addr %s816, 16
        %s818 = scalar_lea.vmem [#allocation10], %s817
        // Predicated region
        $region109: #{tpu_custom_call.1} parent=91 // pred_check
          %p819 = pneg %p337
        $region110: #{tpu_custom_call.1} parent=91 // pred_check_branch
          %821 = sbr.rel (%p819) target = $region112
        $region111: #{tpu_custom_call.1} parent=91 // pred_region
          %823 = dma.done %s815, 256
        $region112: #{tpu_custom_call.1} parent=91 // pred_fallthru
          _
        %s824 = sand.u32 %s44, 1
        %s825 = scalar_lea.sflag [#allocation12], %s824
        %s826 = sand.u32 %s454, 1
        %s827 = scalar_lea.vmem [#allocation11], %s826
        // Predicated region
        $region113: #{tpu_custom_call.1} parent=91 // pred_check
          %p828 = pneg %p467
        $region114: #{tpu_custom_call.1} parent=91 // pred_check_branch
          %830 = sbr.rel (%p828) target = $region116
        $region115: #{tpu_custom_call.1} parent=91 // pred_region
          %832 = dma.done %s825, 16
        $region116: #{tpu_custom_call.1} parent=91 // pred_fallthru
          _
        %s833 = sand.u32 %s44, 1
        %s834 = scalar_lea.sflag [#allocation12], %s833
        %s835 = sand.u32 %s506, 1
        %s836 = scalar_lea.vmem [#allocation13], %s835
        // Predicated region
        $region117: #{tpu_custom_call.1} parent=91 // pred_check
          %p837 = pneg %p519
        $region118: #{tpu_custom_call.1} parent=91 // pred_check_branch
          %839 = sbr.rel (%p837) target = $region120
        $region119: #{tpu_custom_call.1} parent=91 // pred_region
          %841 = dma.done %s834, 16
        $region120: #{tpu_custom_call.1} parent=91 // pred_fallthru
          _
        %s842 = sand.u32 %s64, 1
        %s843 = scalar_lea.sflag [#allocation3], %s842
        %s844 = sand.u32 %s64, 1
        %s845 = smul.addr %s844, 8
        %s846 = scalar_lea.vmem [#allocation2], %s845
        %p847 = pneg %p77
        %p848 = pneg %p74
        %s849 = sand.u32 %s44, 1
        %s850 = scalar_lea.sflag [#allocation6], %s849
        %s851 = sand.u32 %s90, 1
        %s852 = scalar_lea.vmem [#allocation5], %s851
        %p853 = pneg %p103
        %p854 = pneg %p100
        %p855 = scmp.lt.s32.totalorder %s49, 1
        %s856 = scalar_select %p855, %s49, 1
        %s857 = smul.addr %s856, 4
        %s858 = smul.addr %s857, 4
        %s859 = scalar_lea.vmem %s2, %s858
        %p860 = pneg %p129
        %p861 = pneg %p126
        %s862 = sand.u32 %s44, 1
        %s863 = scalar_lea.sflag [#allocation6], %s862
        %s864 = sand.u32 %s142, 1
        %s865 = scalar_lea.vmem [#allocation7], %s864
        %p866 = pneg %p155
        %p867 = pneg %p152
        %p868 = scmp.lt.s32.totalorder %s49, 1
        %s869 = scalar_select %p868, %s49, 1
        %s870 = smul.addr %s869, 4
        %s871 = smul.addr %s870, 4
        %s872 = scalar_lea.vmem %s4, %s871
        %p873 = pneg %p181
        %p874 = pneg %p178
        %p875 = scmp.lt.s32.totalorder %s49, 1
        %s876 = scalar_select %p875, %s49, 1
        %s877 = scalar_lea.vmem %s5, %s876
        %p878 = pneg %p207
        %p879 = pneg %p204
        %p880 = scmp.lt.s32.totalorder %s49, 1
        %s881 = scalar_select %p880, %s49, 1
        %s882 = smul.addr %s881, 4
        %s883 = smul.addr %s882, 4
        %s884 = scalar_lea.vmem %s6, %s883
        %p885 = pneg %p233
        %p886 = pneg %p230
        %p887 = scmp.lt.s32.totalorder %s49, 1
        %s888 = scalar_select %p887, %s49, 1
        %s889 = scalar_lea.vmem %s7, %s888
        %p890 = pneg %p259
        %p891 = pneg %p256
        %s892 = sand.u32 %s44, 1
        %s893 = scalar_lea.sflag [#allocation9], %s892
        %s894 = sand.u32 %s272, 1
        %s895 = smul.addr %s894, 16
        %s896 = scalar_lea.vmem [#allocation8], %s895
        %p897 = pneg %p285
        %p898 = pneg %p282
        %p899 = scmp.lt.s32.totalorder %s49, 1
        %s900 = scalar_select %p899, %s49, 1
        %s901 = scalar_lea.vmem %s9, %s900
        %p902 = pneg %p311
        %p903 = pneg %p308
        %s904 = sand.u32 %s44, 1
        %s905 = scalar_lea.sflag [#allocation9], %s904
        %s906 = sand.u32 %s324, 1
        %s907 = smul.addr %s906, 16
        %s908 = scalar_lea.vmem [#allocation10], %s907
        %p909 = pneg %p337
        %p910 = pneg %p334
        %p911 = scmp.lt.s32.totalorder %s49, 1
        %s912 = scalar_select %p911, %s49, 1
        %s913 = scalar_lea.vmem %s11, %s912
        %p914 = pneg %p363
        %p915 = pneg %p360
        %p916 = scmp.lt.s32.totalorder %s49, 1
        %s917 = scalar_select %p916, %s49, 1
        %s918 = smul.addr %s917, 8
        %s919 = smul.addr %s918, 4
        %s920 = scalar_lea.vmem %s12, %s919
        %p921 = pneg %p389
        %p922 = pneg %p386
        %p923 = scmp.lt.s32.totalorder %s49, 1
        %s924 = scalar_select %p923, %s49, 1
        %s925 = scalar_lea.vmem %s13, %s924
        %p926 = pneg %p415
        %p927 = pneg %p412
        %p928 = scmp.lt.s32.totalorder %s49, 1
        %s929 = scalar_select %p928, %s49, 1
        %s930 = scalar_lea.vmem %s14, %s929
        %p931 = pneg %p441
        %p932 = pneg %p438
        %s933 = sand.u32 %s44, 1
        %s934 = scalar_lea.sflag [#allocation12], %s933
        %s935 = sand.u32 %s454, 1
        %s936 = scalar_lea.vmem [#allocation11], %s935
        %p937 = pneg %p467
        %p938 = pneg %p464
        %p939 = scmp.lt.s32.totalorder %s49, 1
        %s940 = scalar_select %p939, %s49, 1
        %s941 = scalar_lea.vmem %s16, %s940
        %p942 = pneg %p493
        %p943 = pneg %p490
        %s944 = sand.u32 %s44, 1
        %s945 = scalar_lea.sflag [#allocation12], %s944
        %s946 = sand.u32 %s506, 1
        %s947 = scalar_lea.vmem [#allocation13], %s946
        %p948 = pneg %p519
        %p949 = pneg %p516
        %p950 = pneg %p545
        %p951 = pneg %p542
        %s952 = sand.u32 %s532, 1
        %s953 = scalar_lea.sflag [#allocation4], %s952
        %s954 = sand.u32 %s532, 1
        %s955 = smul.addr %s954, 8
        %s956 = scalar_lea.vmem [#allocation14], %s955
        %p957 = scmp.lt.s32.totalorder %s49, 1
        %s958 = scalar_select %p957, %s49, 1
        %s959 = smul.addr %s958, 4
        %s960 = smul.addr %s959, 4
        %s961 = scalar_lea.vmem %s2, %s960
        %p962 = scmp.lt.s32.totalorder %s49, 1
        %s963 = scalar_select %p962, %s49, 1
        %s964 = smul.addr %s963, 4
        %s965 = smul.addr %s964, 4
        %s966 = scalar_lea.vmem %s4, %s965
        %p967 = scmp.lt.s32.totalorder %s49, 1
        %s968 = scalar_select %p967, %s49, 1
        %s969 = scalar_lea.vmem %s5, %s968
        %p970 = scmp.lt.s32.totalorder %s49, 1
        %s971 = scalar_select %p970, %s49, 1
        %s972 = smul.addr %s971, 4
        %s973 = smul.addr %s972, 4
        %s974 = scalar_lea.vmem %s6, %s973
        %p975 = scmp.lt.s32.totalorder %s49, 1
        %s976 = scalar_select %p975, %s49, 1
        %s977 = scalar_lea.vmem %s7, %s976
        %p978 = scmp.lt.s32.totalorder %s49, 1
        %s979 = scalar_select %p978, %s49, 1
        %s980 = scalar_lea.vmem %s9, %s979
        %p981 = scmp.lt.s32.totalorder %s49, 1
        %s982 = scalar_select %p981, %s49, 1
        %s983 = scalar_lea.vmem %s11, %s982
        %p984 = scmp.lt.s32.totalorder %s49, 1
        %s985 = scalar_select %p984, %s49, 1
        %s986 = smul.addr %s985, 8
        %s987 = smul.addr %s986, 4
        %s988 = scalar_lea.vmem %s12, %s987
        %p989 = scmp.lt.s32.totalorder %s49, 1
        %s990 = scalar_select %p989, %s49, 1
        %s991 = scalar_lea.vmem %s13, %s990
        %p992 = scmp.lt.s32.totalorder %s49, 1
        %s993 = scalar_select %p992, %s49, 1
        %s994 = scalar_lea.vmem %s14, %s993
        %p995 = scmp.lt.s32.totalorder %s49, 1
        %s996 = scalar_select %p995, %s49, 1
        %s997 = scalar_lea.vmem %s16, %s996
        %p999 = scmp.eq.s32.totalorder %s49, 0
        // Predicated region
        $region121: #{tpu_custom_call.1} parent=91 // pred_check
          %p1000 = pneg %p999
        $region122: #{tpu_custom_call.1} parent=91 // pred_check_branch
          %1002 = sbr.rel (%p1000) target = $region124
        $region123: #{tpu_custom_call.1} parent=91 // pred_region
          %v1003 = vld [vmem:[%s780] sm:$0xff]
          %vm1004 = vcmask 261120
          %1005 = vst.msk [vmem:[%s956] sm:$0xff] %vm1004, %v1003
        $region124: #{tpu_custom_call.1} parent=91 // pred_fallthru
          _
        %v1006 = vld [vmem:[%s956] sm:$0xff]
        %v1007 = vpack.c.bf16 %v1006, %v1006
        %v1008 = vld [vmem:[%s961] sm:$0xf]
        %v1009 = vld [vmem:[%s961 + $0x4] sm:$0xf]
        %v1010 = vld [vmem:[%s961 + $0x8] sm:$0xf]
        %v1011 = vld [vmem:[%s961 + $0xc] sm:$0xf]
        %v1012 = vld [vmem:[%s966] sm:$0xf]
        %v1013 = vld [vmem:[%s966 + $0x4] sm:$0xf]
        %v1014 = vld [vmem:[%s966 + $0x8] sm:$0xf]
        %v1015 = vld [vmem:[%s966 + $0xc] sm:$0xf]
        %v1016 = vld [vmem:[%s974] sm:$0xf]
        %v1017 = vld [vmem:[%s974 + $0x4] sm:$0xf]
        %v1018 = vld [vmem:[%s974 + $0x8] sm:$0xf]
        %v1019 = vld [vmem:[%s974 + $0xc] sm:$0xf]
        %v1020 = vld [vmem:[%s808] sm:$0xf]
        %v1021 = vld [vmem:[%s808 + $0x4] sm:$0xf]
        %v1022 = vld [vmem:[%s808 + $0x8] sm:$0xf]
        %v1023 = vld [vmem:[%s808 + $0xc] sm:$0xf]
        %v1024 = vld [vmem:[%s798] sm:$0x1]
        %v1025 = vld [vmem:[%s969] sm:$0x1]
        %v1026 = vld [vmem:[%s977] sm:$0x1]
        %v1027 = vld [vmem:[%s980] sm:$0x1]
        %v1029 = vperm.slane %v1024, 0
        %v1035 = vunpack.c.l.b16 %v1008
        %v1036 = vunpack.c.l.b16 %v1009
        %v1037 = vunpack.c.l.b16 %v1010
        %v1038 = vunpack.c.l.b16 %v1011
        %v1039 = vpack.c.b16 %v1036, %v1035
        %v1040 = vpack.c.b16 %v1038, %v1037
        %vm1043 = vcmask 261120
        %v1045 = vsel %vm1043, %v1007, 0
        %1047 = vmatpush.bf16.msra.mxu0 0
        %1048 = vmatpush.bf16.msra.mxu0 0
        %1049 = vmatpush.bf16.msra.mxu0 0
        %1050 = vmatpush.bf16.msra.mxu0 0
        %1051 = vmatpush.bf16.msra.mxu0 0
        %1052 = vmatpush.bf16.msra.mxu0 0
        %1053 = vmatpush.bf16.msra.mxu0 %v1040
        %1054 = vmatpush.bf16.msra.mxu0 %v1039
        %1055 = vmatmul.bf16.gmra.mxu0 %v1045
        %v1056 = vpop.f32.mrf.mxu0
        %v1057 = vadd.f32 %v1029, %v1056
        %v1058 = vpop.f32.mrf.mxu0
        %1059 = vdwg.mxu0
        %v1061 = vperm.slane %v1025, 0
        %v1067 = vunpack.c.l.b16 %v1012
        %v1068 = vunpack.c.l.b16 %v1013
        %v1069 = vunpack.c.l.b16 %v1014
        %v1070 = vunpack.c.l.b16 %v1015
        %v1071 = vpack.c.b16 %v1068, %v1067
        %v1072 = vpack.c.b16 %v1070, %v1069
        %1075 = vmatpush.bf16.msra.mxu0 0
        %1076 = vmatpush.bf16.msra.mxu0 0
        %1077 = vmatpush.bf16.msra.mxu0 0
        %1078 = vmatpush.bf16.msra.mxu0 0
        %1079 = vmatpush.bf16.msra.mxu0 0
        %1080 = vmatpush.bf16.msra.mxu0 0
        %1081 = vmatpush.bf16.msra.mxu0 %v1072
        %1082 = vmatpush.bf16.msra.mxu0 %v1071
        %1083 = vmatmul.bf16.gmra.mxu0 %v1045
        %v1084 = vpop.f32.mrf.mxu0
        %v1085 = vadd.f32 %v1061, %v1084
        %v1086 = vpop.f32.mrf.mxu0
        %1087 = vdwg.mxu0
        %v1089 = vperm.slane %v1026, 0
        %v1095 = vunpack.c.l.b16 %v1016
        %v1096 = vunpack.c.l.b16 %v1017
        %v1097 = vunpack.c.l.b16 %v1018
        %v1098 = vunpack.c.l.b16 %v1019
        %v1099 = vpack.c.b16 %v1096, %v1095
        %v1100 = vpack.c.b16 %v1098, %v1097
        %1103 = vmatpush.bf16.msra.mxu0 0
        %1104 = vmatpush.bf16.msra.mxu0 0
        %1105 = vmatpush.bf16.msra.mxu0 0
        %1106 = vmatpush.bf16.msra.mxu0 0
        %1107 = vmatpush.bf16.msra.mxu0 0
        %1108 = vmatpush.bf16.msra.mxu0 0
        %1109 = vmatpush.bf16.msra.mxu0 %v1100
        %1110 = vmatpush.bf16.msra.mxu0 %v1099
        %1111 = vmatmul.bf16.gmra.mxu0 %v1045
        %v1112 = vpop.f32.mrf.mxu0
        %v1113 = vadd.f32 %v1089, %v1112
        %v1114 = vpop.f32.mrf.mxu0
        %1115 = vdwg.mxu0
        %v1116 = vmul.f32 %v1057, 0.35355338
        %v1117 = vpack.c.bf16 %v1116, %v1116
        %v1118 = vpack.c.bf16 %v1085, %v1085
        %v1119 = vpack.c.bf16 %v1113, %v1113
        %v1120 = vld [vmem:[%s789] sm:$0x1]
        %v1122 = vperm.slane %v1120, 0
        %vm1124 = vcmask 64512
        %v1126 = vsel %vm1124, %v1117, 0
        %v1129 = vsel %vm1124, %v1118, 0
        %1131 = vmatpush.bf16.xpose.msra.mxu0 0
        %1132 = vmatpush.bf16.xpose.msra.mxu0 0
        %1133 = vmatpush.bf16.xpose.msra.mxu0 0
        %1134 = vmatpush.bf16.xpose.msra.mxu0 0
        %1135 = vmatpush.bf16.xpose.msra.mxu0 0
        %1136 = vmatpush.bf16.xpose.msra.mxu0 0
        %1137 = vmatpush.bf16.xpose.msra.mxu0 0
        %1138 = vmatpush.bf16.xpose.msra.mxu0 %v1129
        %1139 = vmatmul.bf16.gmra.mxu0 %v1126
        %v1140 = vpop.f32.mrf.mxu0
        %v1141 = vadd.f32 %v1122, %v1140
        %v1142 = vpop.f32.mrf.mxu0
        %1143 = vdwg.mxu0
        %v1144 = vsel %vm1124, %v1141, -inf
        %1145 = vmax.xlane.f32.xlu0 %v1144
        %v1146 = vpop.xlane.xlu0 %1145
        %v1147 = vsub.f32 %v1141, %v1146
        %v1148 = vmul.f32 %v1147, 1.442695
        %v1149 = vpow.pop %v1148
        %v1150 = vsel %vm1124, %v1149, 0.0
        %1151 = vadd.xlane.f32.xlu0 %v1150
        %v1152 = vpop.xlane.xlu0 %1151
        %v1153 = vrcp.pop %v1152
        %v1154 = vpack.c.bf16 %v1149, %v1149
        %v1156 = vsel %vm1124, %v1154, 0
        %vm1158 = vcmask 1043456
        %v1160 = vsel %vm1158, %v1119, 0
        %1162 = vmatpush.bf16.msra.mxu0 0
        %1163 = vmatpush.bf16.msra.mxu0 0
        %1164 = vmatpush.bf16.msra.mxu0 0
        %1165 = vmatpush.bf16.msra.mxu0 0
        %1166 = vmatpush.bf16.msra.mxu0 0
        %1167 = vmatpush.bf16.msra.mxu0 0
        %1168 = vmatpush.bf16.msra.mxu0 0
        %1169 = vmatpush.bf16.msra.mxu0 %v1160
        %1170 = vmatmul.bf16.gmra.mxu0 %v1156
        %v1171 = vpop.f32.mrf.mxu0
        %v1172 = vadd.f32 0.0, %v1171
        %v1173 = vpop.f32.mrf.mxu0
        %1174 = vdwg.mxu0
        %v1175 = vmul.f32 %v1172, %v1153
        %v1177 = vunpack.c.l.b16 %v1117
        %v1178 = vpack.c.b16 %v1177, %v1177
        %1179 = vrot.lane.b32.xlu0 %v1178, 120
        %v1180 = vpop.permute.xlu0 %1179
        %v1182 = vunpack.c.l.b16 %v1118
        %v1183 = vpack.c.b16 %v1182, %v1182
        %1184 = vrot.lane.b32.xlu0 %v1183, 120
        %v1185 = vpop.permute.xlu0 %1184
        %v1187 = vsel %vm1124, %v1180, 0
        %v1190 = vsel %vm1124, %v1185, 0
        %1192 = vmatpush.bf16.xpose.msra.mxu0 0
        %1193 = vmatpush.bf16.xpose.msra.mxu0 0
        %1194 = vmatpush.bf16.xpose.msra.mxu0 0
        %1195 = vmatpush.bf16.xpose.msra.mxu0 0
        %1196 = vmatpush.bf16.xpose.msra.mxu0 0
        %1197 = vmatpush.bf16.xpose.msra.mxu0 0
        %1198 = vmatpush.bf16.xpose.msra.mxu0 0
        %1199 = vmatpush.bf16.xpose.msra.mxu0 %v1190
        %1200 = vmatmul.bf16.gmra.mxu0 %v1187
        %v1201 = vpop.f32.mrf.mxu0
        %v1202 = vadd.f32 %v1122, %v1201
        %v1203 = vpop.f32.mrf.mxu0
        %1204 = vdwg.mxu0
        %v1205 = vsel %vm1124, %v1202, -inf
        %1206 = vmax.xlane.f32.xlu0 %v1205
        %v1207 = vpop.xlane.xlu0 %1206
        %v1208 = vsub.f32 %v1202, %v1207
        %v1209 = vmul.f32 %v1208, 1.442695
        %v1210 = vpow.pop %v1209
        %v1211 = vsel %vm1124, %v1210, 0.0
        %1212 = vadd.xlane.f32.xlu0 %v1211
        %v1213 = vpop.xlane.xlu0 %1212
        %v1214 = vrcp.pop %v1213
        %v1215 = vpack.c.bf16 %v1210, %v1210
        %v1217 = vunpack.c.l.b16 %v1119
        %v1218 = vpack.c.b16 %v1217, %v1217
        %1219 = vrot.lane.b32.xlu0 %v1218, 120
        %v1220 = vpop.permute.xlu0 %1219
        %v1222 = vsel %vm1124, %v1215, 0
        %v1225 = vsel %vm1158, %v1220, 0
        %1227 = vmatpush.bf16.msra.mxu0 0
        %1228 = vmatpush.bf16.msra.mxu0 0
        %1229 = vmatpush.bf16.msra.mxu0 0
        %1230 = vmatpush.bf16.msra.mxu0 0
        %1231 = vmatpush.bf16.msra.mxu0 0
        %1232 = vmatpush.bf16.msra.mxu0 0
        %1233 = vmatpush.bf16.msra.mxu0 0
        %1234 = vmatpush.bf16.msra.mxu0 %v1225
        %1235 = vmatmul.bf16.gmra.mxu0 %v1222
        %v1236 = vpop.f32.mrf.mxu0
        %v1237 = vadd.f32 0.0, %v1236
        %v1238 = vpop.f32.mrf.mxu0
        %1239 = vdwg.mxu0
        %v1240 = vmul.f32 %v1237, %v1214
        %1241 = vrot.lane.b32.xlu0 %v1178, 112
        %v1242 = vpop.permute.xlu0 %1241
        %1243 = vrot.lane.b32.xlu0 %v1183, 112
        %v1244 = vpop.permute.xlu0 %1243
        %v1246 = vsel %vm1124, %v1242, 0
        %v1249 = vsel %vm1124, %v1244, 0
        %1251 = vmatpush.bf16.xpose.msra.mxu0 0
        %1252 = vmatpush.bf16.xpose.msra.mxu0 0
        %1253 = vmatpush.bf16.xpose.msra.mxu0 0
        %1254 = vmatpush.bf16.xpose.msra.mxu0 0
        %1255 = vmatpush.bf16.xpose.msra.mxu0 0
        %1256 = vmatpush.bf16.xpose.msra.mxu0 0
        %1257 = vmatpush.bf16.xpose.msra.mxu0 0
        %1258 = vmatpush.bf16.xpose.msra.mxu0 %v1249
        %1259 = vmatmul.bf16.gmra.mxu0 %v1246
        %v1260 = vpop.f32.mrf.mxu0
        %v1261 = vadd.f32 %v1122, %v1260
        %v1262 = vpop.f32.mrf.mxu0
        %1263 = vdwg.mxu0
        %v1264 = vsel %vm1124, %v1261, -inf
        %1265 = vmax.xlane.f32.xlu0 %v1264
        %v1266 = vpop.xlane.xlu0 %1265
        %v1267 = vsub.f32 %v1261, %v1266
        %v1268 = vmul.f32 %v1267, 1.442695
        %v1269 = vpow.pop %v1268
        %v1270 = vsel %vm1124, %v1269, 0.0
        %1271 = vadd.xlane.f32.xlu0 %v1270
        %v1272 = vpop.xlane.xlu0 %1271
        %v1273 = vrcp.pop %v1272
        %v1274 = vpack.c.bf16 %v1269, %v1269
        %1275 = vrot.lane.b32.xlu0 %v1218, 112
        %v1276 = vpop.permute.xlu0 %1275
        %v1278 = vsel %vm1124, %v1274, 0
        %v1281 = vsel %vm1158, %v1276, 0
        %1283 = vmatpush.bf16.msra.mxu0 0
        %1284 = vmatpush.bf16.msra.mxu0 0
        %1285 = vmatpush.bf16.msra.mxu0 0
        %1286 = vmatpush.bf16.msra.mxu0 0
        %1287 = vmatpush.bf16.msra.mxu0 0
        %1288 = vmatpush.bf16.msra.mxu0 0
        %1289 = vmatpush.bf16.msra.mxu0 0
        %1290 = vmatpush.bf16.msra.mxu0 %v1281
        %1291 = vmatmul.bf16.gmra.mxu0 %v1278
        %v1292 = vpop.f32.mrf.mxu0
        %v1293 = vadd.f32 0.0, %v1292
        %v1294 = vpop.f32.mrf.mxu0
        %1295 = vdwg.mxu0
        %v1296 = vmul.f32 %v1293, %v1273
        %1297 = vrot.lane.b32.xlu0 %v1178, 104
        %v1298 = vpop.permute.xlu0 %1297
        %1299 = vrot.lane.b32.xlu0 %v1183, 104
        %v1300 = vpop.permute.xlu0 %1299
        %v1302 = vsel %vm1124, %v1298, 0
        %v1305 = vsel %vm1124, %v1300, 0
        %1307 = vmatpush.bf16.xpose.msra.mxu0 0
        %1308 = vmatpush.bf16.xpose.msra.mxu0 0
        %1309 = vmatpush.bf16.xpose.msra.mxu0 0
        %1310 = vmatpush.bf16.xpose.msra.mxu0 0
        %1311 = vmatpush.bf16.xpose.msra.mxu0 0
        %1312 = vmatpush.bf16.xpose.msra.mxu0 0
        %1313 = vmatpush.bf16.xpose.msra.mxu0 0
        %1314 = vmatpush.bf16.xpose.msra.mxu0 %v1305
        %1315 = vmatmul.bf16.gmra.mxu0 %v1302
        %v1316 = vpop.f32.mrf.mxu0
        %v1317 = vadd.f32 %v1122, %v1316
        %v1318 = vpop.f32.mrf.mxu0
        %1319 = vdwg.mxu0
        %v1320 = vsel %vm1124, %v1317, -inf
        %1321 = vmax.xlane.f32.xlu0 %v1320
        %v1322 = vpop.xlane.xlu0 %1321
        %v1323 = vsub.f32 %v1317, %v1322
        %v1324 = vmul.f32 %v1323, 1.442695
        %v1325 = vpow.pop %v1324
        %v1326 = vsel %vm1124, %v1325, 0.0
        %1327 = vadd.xlane.f32.xlu0 %v1326
        %v1328 = vpop.xlane.xlu0 %1327
        %v1329 = vrcp.pop %v1328
        %v1330 = vpack.c.bf16 %v1325, %v1325
        %1331 = vrot.lane.b32.xlu0 %v1218, 104
        %v1332 = vpop.permute.xlu0 %1331
        %v1334 = vsel %vm1124, %v1330, 0
        %v1337 = vsel %vm1158, %v1332, 0
        %1339 = vmatpush.bf16.msra.mxu0 0
        %1340 = vmatpush.bf16.msra.mxu0 0
        %1341 = vmatpush.bf16.msra.mxu0 0
        %1342 = vmatpush.bf16.msra.mxu0 0
        %1343 = vmatpush.bf16.msra.mxu0 0
        %1344 = vmatpush.bf16.msra.mxu0 0
        %1345 = vmatpush.bf16.msra.mxu0 0
        %1346 = vmatpush.bf16.msra.mxu0 %v1337
        %1347 = vmatmul.bf16.gmra.mxu0 %v1334
        %v1348 = vpop.f32.mrf.mxu0
        %v1349 = vadd.f32 0.0, %v1348
        %v1350 = vpop.f32.mrf.mxu0
        %1351 = vdwg.mxu0
        %v1352 = vmul.f32 %v1349, %v1329
        %1354 = vrot.lane.b32.xlu0 %v1240, 8
        %v1355 = vpop.permute.xlu0 %1354
        %1358 = vrot.lane.b32.xlu0 %v1296, 16
        %v1359 = vpop.permute.xlu0 %1358
        %1362 = vrot.lane.b32.xlu0 %v1352, 24
        %v1363 = vpop.permute.xlu0 %1362
        %v1365 = vsel %vm1124, %v1175, %v1355
        %vm1366 = vcmask 130048
        %v1367 = vsel %vm1366, %v1365, %v1359
        %vm1368 = vcmask 195584
        %v1369 = vsel %vm1368, %v1367, %v1363
        %v1370 = vpack.c.bf16 %v1369, %v1369
        %v1372 = vperm.slane %v1027, 0
        %v1378 = vunpack.c.l.b16 %v1020
        %v1379 = vunpack.c.l.b16 %v1021
        %v1380 = vunpack.c.l.b16 %v1022
        %v1381 = vunpack.c.l.b16 %v1023
        %v1382 = vpack.c.b16 %v1379, %v1378
        %v1383 = vpack.c.b16 %v1381, %v1380
        %v1387 = vsel %vm1043, %v1370, 0
        %1389 = vmatpush.bf16.msra.mxu0 0
        %1390 = vmatpush.bf16.msra.mxu0 0
        %1391 = vmatpush.bf16.msra.mxu0 0
        %1392 = vmatpush.bf16.msra.mxu0 0
        %1393 = vmatpush.bf16.msra.mxu0 0
        %1394 = vmatpush.bf16.msra.mxu0 0
        %1395 = vmatpush.bf16.msra.mxu0 %v1383
        %1396 = vmatpush.bf16.msra.mxu0 %v1382
        %1397 = vmatmul.bf16.gmra.mxu0 %v1387
        %v1398 = vpop.f32.mrf.mxu0
        %v1399 = vadd.f32 %v1372, %v1398
        %v1400 = vpop.f32.mrf.mxu0
        %1401 = vdwg.mxu0
        %v1402 = vadd.f32 %v1006, %v1399
        %v1403 = vld [vmem:[%s994] sm:$0x1]
        %v1404 = vld [vmem:[%s827] sm:$0x1]
        %v1405 = vsel %vm1043, %v1402, 0.0
        %1406 = vadd.xlane.f32.xlu0 %v1405
        %v1407 = vpop.xlane.xlu0 %1406
        %v1408 = vrcp.pop 32.0
        %v1409 = vmul.f32 32.0, %v1408
        %v1410 = vsub.f32 1.0, %v1409
        %v1411 = vmul.f32 %v1408, %v1410
        %v1412 = vadd.f32 %v1408, %v1411
        %vm1413 = vweird.f32 %v1408
        %v1414 = vsel %vm1413, %v1408, %v1412
        %v1415 = vmul.f32 %v1407, %v1414
        %v1416 = vsub.f32 %v1402, %v1415
        %v1417 = vmul.f32 %v1416, %v1416
        %v1418 = vsel %vm1043, %v1417, 0.0
        %1419 = vadd.xlane.f32.xlu0 %v1418
        %v1420 = vpop.xlane.xlu0 %1419
        %v1421 = vmul.f32 %v1420, %v1414
        %v1422 = vadd.f32 %v1421, 1e-05
        %v1423 = vrsqrt.pop %v1422
        %v1424 = vmul.f32 %v1423, %v1422
        %v1425 = vmul.f32 %v1424, %v1423
        %v1426 = vmul.f32 0.5, %v1425
        %v1427 = vsub.f32 1.5, %v1426
        %v1428 = vmul.f32 %v1423, %v1427
        %vm1429 = vweird.f32 %v1422
        %vm1430 = vweird.f32 %v1423
        %vm1431 = vmor %vm1429, %vm1430
        %v1432 = vsel %vm1431, %v1423, %v1428
        %v1433 = vmul.f32 %v1416, %v1432
        %v1435 = vperm.slane %v1403, 0
        %v1437 = vmul.f32 %v1433, %v1435
        %v1439 = vperm.slane %v1404, 0
        %v1441 = vadd.f32 %v1437, %v1439
        %v1442 = vpack.c.bf16 %v1441, %v1441
        %v1443 = vld [vmem:[%s818] sm:$0xf]
        %v1444 = vld [vmem:[%s818 + $0x4] sm:$0xf]
        %v1445 = vld [vmem:[%s818 + $0x8] sm:$0xf]
        %v1446 = vld [vmem:[%s818 + $0xc] sm:$0xf]
        %v1447 = vld [vmem:[%s983] sm:$0x1]
        %v1449 = vperm.slane %v1447, 0
        %v1455 = vunpack.c.l.b16 %v1443
        %v1456 = vunpack.c.l.b16 %v1444
        %v1457 = vunpack.c.l.b16 %v1445
        %v1458 = vunpack.c.l.b16 %v1446
        %v1459 = vpack.c.b16 %v1456, %v1455
        %v1460 = vpack.c.b16 %v1458, %v1457
        %v1464 = vsel %vm1043, %v1442, 0
        %1466 = vmatpush.bf16.msra.mxu0 0
        %1467 = vmatpush.bf16.msra.mxu0 0
        %1468 = vmatpush.bf16.msra.mxu0 0
        %1469 = vmatpush.bf16.msra.mxu0 0
        %1470 = vmatpush.bf16.msra.mxu0 0
        %1471 = vmatpush.bf16.msra.mxu0 0
        %1472 = vmatpush.bf16.msra.mxu0 %v1460
        %1473 = vmatpush.bf16.msra.mxu0 %v1459
        %1474 = vmatmul.bf16.gmra.mxu0 %v1464
        %v1475 = vpop.f32.mrf.mxu0
        %v1476 = vadd.f32 %v1449, %v1475
        %v1477 = vpop.f32.mrf.mxu0
        %1478 = vdwg.mxu0
        %v1479 = vmax.f32 %v1476, 0.0
        %v1480 = vpack.c.bf16 %v1479, %v1479
        %v1481 = vld [vmem:[%s988] sm:$0xf]
        %v1482 = vld [vmem:[%s988 + $0x4] sm:$0xf]
        %v1483 = vld [vmem:[%s988 + $0x8] sm:$0xf]
        %v1484 = vld [vmem:[%s988 + $0xc] sm:$0xf]
        %v1485 = vld [vmem:[%s988 + $0x10] sm:$0xf]
        %v1486 = vld [vmem:[%s988 + $0x14] sm:$0xf]
        %v1487 = vld [vmem:[%s988 + $0x18] sm:$0xf]
        %v1488 = vld [vmem:[%s988 + $0x1c] sm:$0xf]
        %v1489 = vld [vmem:[%s991] sm:$0x1]
        %v1491 = vperm.slane %v1489, 0
        %v1501 = vunpack.c.l.b16 %v1481
        %v1502 = vunpack.c.l.b16 %v1482
        %v1503 = vunpack.c.l.b16 %v1483
        %v1504 = vunpack.c.l.b16 %v1484
        %v1505 = vunpack.c.l.b16 %v1485
        %v1506 = vunpack.c.l.b16 %v1486
        %v1507 = vunpack.c.l.b16 %v1487
        %v1508 = vunpack.c.l.b16 %v1488
        %v1509 = vpack.c.b16 %v1502, %v1501
        %v1510 = vpack.c.b16 %v1504, %v1503
        %v1511 = vpack.c.b16 %v1506, %v1505
        %v1512 = vpack.c.b16 %v1508, %v1507
        %vm1517 = vcmask 523264
        %v1519 = vsel %vm1517, %v1480, 0
        %1521 = vmatpush.bf16.msra.mxu0 0
        %1522 = vmatpush.bf16.msra.mxu0 0
        %1523 = vmatpush.bf16.msra.mxu0 0
        %1524 = vmatpush.bf16.msra.mxu0 0
        %1525 = vmatpush.bf16.msra.mxu0 %v1512
        %1526 = vmatpush.bf16.msra.mxu0 %v1511
        %1527 = vmatpush.bf16.msra.mxu0 %v1510
        %1528 = vmatpush.bf16.msra.mxu0 %v1509
        %1529 = vmatmul.bf16.gmra.mxu0 %v1519
        %v1530 = vpop.f32.mrf.mxu0
        %v1531 = vadd.f32 %v1491, %v1530
        %v1532 = vpop.f32.mrf.mxu0
        %1533 = vdwg.mxu0
        %v1534 = vadd.f32 %v1441, %v1531
        %v1535 = vld [vmem:[%s997] sm:$0x1]
        %v1536 = vld [vmem:[%s836] sm:$0x1]
        %v1537 = vsel %vm1043, %v1534, 0.0
        %1538 = vadd.xlane.f32.xlu0 %v1537
        %v1539 = vpop.xlane.xlu0 %1538
        %v1540 = vmul.f32 %v1539, %v1414
        %v1541 = vsub.f32 %v1534, %v1540
        %v1542 = vmul.f32 %v1541, %v1541
        %v1543 = vsel %vm1043, %v1542, 0.0
        %1544 = vadd.xlane.f32.xlu0 %v1543
        %v1545 = vpop.xlane.xlu0 %1544
        %v1546 = vmul.f32 %v1545, %v1414
        %v1547 = vadd.f32 %v1546, 1e-05
        %v1548 = vrsqrt.pop %v1547
        %v1549 = vmul.f32 %v1548, %v1547
        %v1550 = vmul.f32 %v1549, %v1548
        %v1551 = vmul.f32 0.5, %v1550
        %v1552 = vsub.f32 1.5, %v1551
        %v1553 = vmul.f32 %v1548, %v1552
        %vm1554 = vweird.f32 %v1547
        %vm1555 = vweird.f32 %v1548
        %vm1556 = vmor %vm1554, %vm1555
        %v1557 = vsel %vm1556, %v1548, %v1553
        %v1558 = vmul.f32 %v1541, %v1557
        %v1560 = vperm.slane %v1535, 0
        %v1562 = vmul.f32 %v1558, %v1560
        %v1564 = vperm.slane %v1536, 0
        %v1566 = vadd.f32 %v1562, %v1564
        %1567 = vst.msk [vmem:[%s956] sm:$0xff] %vm1043, %v1566
        %s1568 = sand.u32 %s532, 1
        %s1569 = scalar_lea.sflag [#allocation4], %s1568
        %s1570 = sand.u32 %s532, 1
        %s1571 = smul.addr %s1570, 8
        %s1572 = scalar_lea.vmem [#allocation14], %s1571
        // Predicated region
        $region125: #{tpu_custom_call.1} parent=91 // pred_check
          %p1573 = pneg %p542
        $region126: #{tpu_custom_call.1} parent=91 // pred_check_branch
          %1575 = sbr.rel (%p1573) target = $region128
        $region127: #{tpu_custom_call.1} parent=91 // pred_region
          %1577 = vsyncadd %s1569, 0
          %s1578 = smul.addr %s48, 8
          %s1579 = scalar_lea.hbm %s18, %s1578
          %s1581 = sshll.u32 %s1572, 4
          %s1582 = int_to_ptr.vmem [resolvable:$true] %s1581
          %s1583 = sshll.u32 %s1579, 4
          %s1584 = int_to_ptr.hbm [resolvable:$true] %s1583
          %1586 = dma.vmem_to_hbm [thread:$0]  %s1582, 128, %s1584, %s1569
        $region128: #{tpu_custom_call.1} parent=91 // pred_fallthru
          _
      $region92: #{tpu_custom_call.1} parent=5 // pred_fallthru
        _
      %p1587 = scmp.le.s32.totalorder 2, %s39
      // Predicated region
      $region129: #{tpu_custom_call.1} parent=5 // pred_check
        %p1588 = pneg %p1587
      $region130: #{tpu_custom_call.1} parent=5 // pred_check_branch
        %1590 = sbr.rel (%p1588) target = $region132
      $region131: #{tpu_custom_call.1} parent=5 // pred_region
        %s1591 = ssub.s32 %s39, 2
        // Predicated region
        $region133: #{tpu_custom_call.1} parent=131 // pred_check
          %p1592 = pneg %p548
        $region134: #{tpu_custom_call.1} parent=131 // pred_check_branch
          %1594 = sbr.rel (%p1592) target = $region136
        $region135: #{tpu_custom_call.1} parent=131 // pred_region
          %s1595 = sand.u32 %s533, 1
          %s1596 = scalar_lea.sflag [#allocation4], %s1595
          %s1597 = sand.u32 %s533, 1
          %s1598 = smul.addr %s1597, 8
          %s1599 = scalar_lea.vmem [#allocation14], %s1598
          %1601 = dma.done %s1596, 128
        $region136: #{tpu_custom_call.1} parent=131 // pred_fallthru
          _
      $region132: #{tpu_custom_call.1} parent=5 // pred_fallthru
        _
    $region6: #{tpu_custom_call.1} parent=1 // loop_footer
      %s43 = sadd.s32 1, %s39
    $region7: #{tpu_custom_call.1} parent=1 // loop_footer_branch
      %38 = sbr.rel target = $region3
    $region8: #{tpu_custom_call.1} parent=1 // loop_exit
      _
    %1602 = vsyncpa [#allocation3], 1
    %s1603 = scalar_lea.sflag [#allocation3], 1
    %1604 = vsyncpa %s1603, 1
    %1605 = vsyncpa [#allocation6], 1
    %s1606 = scalar_lea.sflag [#allocation6], 1
    %1607 = vsyncpa %s1606, 1
    %1608 = vsyncpa [#allocation9], 1
    %s1609 = scalar_lea.sflag [#allocation9], 1
    %1610 = vsyncpa %s1609, 1
    %1611 = vsyncpa [#allocation12], 1
    %s1612 = scalar_lea.sflag [#allocation12], 1
    %1613 = vsyncpa %s1612, 1
    %1614 = vsyncpa [#allocation4], 1
    %s1615 = scalar_lea.sflag [#allocation4], 1
    %1616 = vsyncpa %s1615, 1

</llo_original>
